<compile_context>
chip_gen: v5e
topology: v5e:2x2
jax: 0.10.0
libtpu: 0.0.40
codegen_flags: <defaults>
</compile_context>

<pallas_src>
import functools

import jax
import jax.numpy as jnp
from jax.experimental import pallas as pl
from jax.experimental.pallas import tpu as pltpu

BN_EPS = 1e-5


def _round_up(x, m):
    return ((x + m - 1) // m) * m


def _vmem_budget_bytes():
    """Scoped-VMEM budget derived from the actual chip (v5e/v6e 128 MiB, v7x 64 MiB)."""
    try:
        cap = pltpu.get_tpu_info().vmem_capacity_bytes
    except Exception:
        cap = 64 * 1024 * 1024
    return max(32 * 1024 * 1024, min(cap // 2, 64 * 1024 * 1024))


def _pick_m_tile(mp, budget_bytes):
    # Prefer a tile that yields >=2 blocks so a "parallel" axis can shard
    # across v7x's two TensorCores; fall back to any divisor, else full M.
    cands = (1024, 512, 256, 128) if budget_bytes >= 64 * 1024 * 1024 else (512, 256, 128)
    for c in cands:
        if mp % c == 0 and mp // c >= 2:
            return c
    for c in cands:
        if mp % c == 0:
            return c
    return mp


def _pick_n_tile(cout):
    # Keep Cout as a single full block unless it is large and 128-aligned.
    if cout <= 512 or cout % 128 != 0:
        return cout
    for c in (512, 256, 128):
        if cout % c == 0:
            return c
    return cout


# --------------------------------------------------------------------------
# Pallas kernels
# --------------------------------------------------------------------------
def _matmul_bias_relu6_kernel(x_ref, w_ref, b_ref, o_ref):
    """One (tm, tn) tile of relu6(x @ w + b).  K is un-tiled (full block)."""
    acc = jnp.dot(x_ref[...].astype(jnp.bfloat16), w_ref[...],
                  preferred_element_type=jnp.float32)
    o_ref[...] = jnp.clip(acc + b_ref[...], 0.0, 6.0).astype(o_ref.dtype)


def _branch2_pool_kernel(x_ref, w_ref, b_ref, conv_ref, pool_ref, *, cin, taps):
    """Fused branch2 (3x3 s2 conv+BN+ReLU6) and branch1 (3x3 s2 max-pool).

    x_ref holds the tap-major im2col patches (tm, taps*cin) of the ORIGINAL
    input in f32; those 9 taps are exactly the max-pool window, so the pool is
    a free VPU reduction over lane slices while the MXU does the conv."""
    x = x_ref[...]                                       # (tm, taps*cin) f32
    acc = jnp.dot(x.astype(jnp.bfloat16), w_ref[...],
                  preferred_element_type=jnp.float32)
    conv_ref[...] = jnp.clip(acc + b_ref[...], 0.0, 6.0).astype(conv_ref.dtype)

    m = x[:, 0:cin]
    for t in range(1, taps):                             # static unrolled taps
        m = jnp.maximum(m, x[:, t * cin:(t + 1) * cin])
    pool_ref[...] = m.astype(pool_ref.dtype)


# --------------------------------------------------------------------------
# Generic tiled matmul + BN-fold bias + ReLU6
# --------------------------------------------------------------------------
def _matmul_bn_relu6(patches, w_fold, b_fold, out_dtype=jnp.float32):
    """relu6(patches @ w_fold + b_fold) as a tiled, pipelined Pallas matmul.

    patches: (M, K) f32|bf16   w_fold: (K, Cout) f32   b_fold: (Cout,) f32
    Returns: (M, Cout) out_dtype
    """
    M, K = patches.shape
    Cout = w_fold.shape[1]

    Mp = _round_up(M, 8)                    # sublane granularity only
    x = patches if Mp == M else jnp.pad(patches, ((0, Mp - M), (0, 0)))
    w = w_fold.astype(jnp.bfloat16)         # tiny; cast once in wrapper
    b = b_fold.astype(jnp.float32).reshape(1, Cout)

    budget = _vmem_budget_bytes()
    tm = _pick_m_tile(Mp, budget)
    tn = _pick_n_tile(Cout)
    grid = (Mp // tm, Cout // tn)

    cost = pl.CostEstimate(
        flops=2 * Mp * K * Cout,
        transcendentals=0,
        bytes_accessed=(Mp * K * x.dtype.itemsize + K * Cout * 2
                        + Mp * Cout * jnp.dtype(out_dtype).itemsize + Cout * 4))

    out = pl.pallas_call(
        _matmul_bias_relu6_kernel,
        out_shape=jax.ShapeDtypeStruct((Mp, Cout), out_dtype),
        grid=grid,
        in_specs=[
            pl.BlockSpec((tm, K), lambda i, j: (i, 0)),    # full-K block: no pad
            pl.BlockSpec((K, tn), lambda i, j: (0, j)),
            pl.BlockSpec((1, tn), lambda i, j: (0, j)),
        ],
        out_specs=pl.BlockSpec((tm, tn), lambda i, j: (i, j)),
        compiler_params=pltpu.CompilerParams(
            dimension_semantics=("parallel", "parallel"),
            vmem_limit_bytes=budget),
        cost_estimate=cost,
    )(x, w, b)

    return out[:M] if Mp != M else out


# --------------------------------------------------------------------------
# Glue: BN fold + im2col patch extraction (plain JAX)
# --------------------------------------------------------------------------
def _fold_bn(p):
    """Fold BatchNorm (inference stats) into conv weights/bias.
    Returns (KH*KW*Cin, Cout) weights and (Cout,) bias."""
    cout, cin, kh, kw = p["w"].shape
    s = p["gamma"] / jnp.sqrt(p["var"] + BN_EPS)
    w_flat = jnp.transpose(p["w"], (2, 3, 1, 0)).reshape(kh * kw * cin, cout)
    w_fold = w_flat * s[None, :]
    b_fold = (p["b"] - p["mean"]) * s + p["beta"]
    return w_fold, b_fold


def _extract_patches(x_nhwc, kh, kw, stride, padding):
    """Tap-major im2col: (N*Ho*Wo, kh*kw*C), matching _fold_bn ordering."""
    N, H, W, C = x_nhwc.shape
    if padding > 0:
        x_nhwc = jnp.pad(
            x_nhwc, ((0, 0), (padding, padding), (padding, padding), (0, 0)))
        H += 2 * padding
        W += 2 * padding
    Ho = (H - kh) // stride + 1
    Wo = (W - kw) // stride + 1
    if kh == 1 and kw == 1 and stride == 1:
        return x_nhwc.reshape(N * Ho * Wo, C), (N, Ho, Wo)   # free reshape
    taps = []
    for i in range(kh):
        for j in range(kw):
            taps.append(
                x_nhwc[:, i:i + stride * (Ho - 1) + 1:stride,
                       j:j + stride * (Wo - 1) + 1:stride, :])
    patches = jnp.stack(taps, axis=3).reshape(N * Ho * Wo, kh * kw * C)
    return patches, (N, Ho, Wo)


# --------------------------------------------------------------------------
# ConvBNReLU layer
# --------------------------------------------------------------------------
def conv_bn_relu6(x_nhwc, params, stride, padding, out_dtype=jnp.float32):
    cout, cin, kh, kw = params["w"].shape
    w_fold, b_fold = _fold_bn(params)
    patches, (N, Ho, Wo) = _extract_patches(x_nhwc, kh, kw, stride, padding)
    y = _matmul_bn_relu6(patches, w_fold, b_fold, out_dtype=out_dtype)
    return y.reshape(N, Ho, Wo, cout)


# --------------------------------------------------------------------------
# Fused branch2 (3x3/s2 conv+BN+ReLU6) + branch1 (3x3/s2 max-pool)
# --------------------------------------------------------------------------
def branch2_with_pool(x_nhwc, p_branch2):
    """Returns (branch2_out (N,Ho,Wo,n) f32, branch1_pool (N,Ho,Wo,Cin) f32)."""
    N, H, W, C = x_nhwc.shape
    w_fold, b_fold = _fold_bn(p_branch2)
    n_ch = w_fold.shape[1]

    patches, (N, Ho, Wo) = _extract_patches(x_nhwc, 3, 3, 2, 0)   # f32, tap-major
    M, K = patches.shape
    taps = 9

    Mp = _round_up(M, 8)
    x = patches if Mp == M else jnp.pad(patches, ((0, Mp - M), (0, 0)))
    w = w_fold.astype(jnp.bfloat16)
    b = b_fold.astype(jnp.float32).reshape(1, n_ch)

    budget = _vmem_budget_bytes()
    tm = _pick_m_tile(Mp, budget)
    grid = (Mp // tm,)

    cost = pl.CostEstimate(
        flops=2 * Mp * K * n_ch,
        transcendentals=0,
        bytes_accessed=Mp * K * 4 + K * n_ch * 2 + Mp * n_ch * 4 + Mp * C * 4)

    conv_out, pool_out = pl.pallas_call(
        functools.partial(_branch2_pool_kernel, cin=C, taps=taps),
        out_shape=(jax.ShapeDtypeStruct((Mp, n_ch), jnp.float32),
                   jax.ShapeDtypeStruct((Mp, C), x_nhwc.dtype)),
        grid=grid,
        in_specs=[
            pl.BlockSpec((tm, K), lambda i: (i, 0)),
            pl.BlockSpec((K, n_ch), lambda i: (0, 0)),
            pl.BlockSpec((1, n_ch), lambda i: (0, 0)),
        ],
        out_specs=[
            pl.BlockSpec((tm, n_ch), lambda i: (i, 0)),
            pl.BlockSpec((tm, C), lambda i: (i, 0)),
        ],
        compiler_params=pltpu.CompilerParams(
            dimension_semantics=("parallel",),
            vmem_limit_bytes=budget),
        cost_estimate=cost,
    )(x, w, b)

    conv_out = conv_out[:M].reshape(N, Ho, Wo, n_ch)
    pool_out = pool_out[:M].reshape(N, Ho, Wo, C)
    return conv_out, pool_out


# --------------------------------------------------------------------------
# Reduction_A forward (NHWC internally, one transpose at each boundary)
# --------------------------------------------------------------------------
def reduction_a_forward(x_nchw, params):
    x_nhwc = jnp.transpose(x_nchw, (0, 2, 3, 1))

    # branch2 conv and branch1 max-pool share one im2col read / one kernel.
    b2, b1 = branch2_with_pool(x_nhwc, params["branch2"])

    # branch3: 1x1 -> 3x3 pad1 -> 3x3 s2 ; intermediates emitted in bf16.
    b3 = conv_bn_relu6(x_nhwc, params["branch3_0"], 1, 0, out_dtype=jnp.bfloat16)
    b3 = conv_bn_relu6(b3, params["branch3_1"], 1, 1, out_dtype=jnp.bfloat16)
    b3 = conv_bn_relu6(b3, params["branch3_2"], 2, 0, out_dtype=jnp.float32)

    # channel order matches torch.cat([branch1, branch2, branch3], dim=1)
    out_nhwc = jnp.concatenate([b1, b2, b3], axis=-1)
    return jnp.transpose(out_nhwc, (0, 3, 1, 2))      # single NHWC->NCHW


# --------------------------------------------------------------------------
# Deterministic parameter construction (ConvBNReLU: conv + BN params)
# --------------------------------------------------------------------------
def make_conv_bn_params(key, cin, cout, ksize):
    kw_, kb_, kg_, kbeta_, km_, kv_ = jax.random.split(key, 6)
    return {
        "w": 0.1 * jax.random.normal(kw_, (cout, cin, ksize, ksize), jnp.float32),
        "b": 0.05 * jax.random.normal(kb_, (cout,), jnp.float32),
        "gamma": jax.random.uniform(kg_, (cout,), jnp.float32, 0.5, 1.5),
        "beta": 0.05 * jax.random.normal(kbeta_, (cout,), jnp.float32),
        "mean": 0.05 * jax.random.normal(km_, (cout,), jnp.float32),
        "var": jax.random.uniform(kv_, (cout,), jnp.float32, 0.5, 1.5),
    }


# --------------------------------------------------------------------------
# Pure-JAX f32 reference (module semantics)
# --------------------------------------------------------------------------
def _ref_conv_bn_relu6(x_nchw, p, stride, padding):
    y = jax.lax.conv_general_dilated(
        x_nchw, p["w"], (stride, stride),
        [(padding, padding), (padding, padding)],
        dimension_numbers=("NCHW", "OIHW", "NCHW"))
    y = y + p["b"][None, :, None, None]
    s = p["gamma"] / jnp.sqrt(p["var"] + BN_EPS)
    y = y * s[None, :, None, None] + (p["beta"] - p["mean"] * s)[None, :, None, None]
    return jnp.clip(y, 0.0, 6.0)


def _ref_forward(x_nchw, params):
    b1 = jax.lax.reduce_window(
        x_nchw, -jnp.inf, jax.lax.max,
        window_dimensions=(1, 1, 3, 3), window_strides=(1, 1, 2, 2),
        padding="VALID")
    b2 = _ref_conv_bn_relu6(x_nchw, params["branch2"], 2, 0)
    b3 = _ref_conv_bn_relu6(x_nchw, params["branch3_0"], 1, 0)
    b3 = _ref_conv_bn_relu6(b3, params["branch3_1"], 1, 1)
    b3 = _ref_conv_bn_relu6(b3, params["branch3_2"], 2, 0)
    return jnp.concatenate([b1, b2, b3], axis=1)


if __name__ == "__main__":
    key = jax.random.PRNGKey(0)
    k_x, k_b2, k_b30, k_b31, k_b32 = jax.random.split(key, 5)

    # Reduction_A(in_channels=8, k=8, l=8, m=8, n=8), input (N=2, C=8, H=W=16)
    in_channels, kk, ll, mm, nn = 8, 8, 8, 8, 8
    x = jax.random.normal(k_x, (2, in_channels, 16, 16), jnp.float32)

    params = {
        "branch2": make_conv_bn_params(k_b2, in_channels, nn, 3),
        "branch3_0": make_conv_bn_params(k_b30, in_channels, kk, 1),
        "branch3_1": make_conv_bn_params(k_b31, kk, ll, 3),
        "branch3_2": make_conv_bn_params(k_b32, ll, mm, 3),
    }

    fwd = jax.jit(reduction_a_forward)
    out = jax.block_until_ready(fwd(x, params))
    ref = jax.block_until_ready(_ref_forward(x, params))

    expected_shape = (2, in_channels + nn + mm, 7, 7)
    assert out.shape == expected_shape, (out.shape, expected_shape)
    # bf16 MXU feed (f32 accumulate, bf16 intermediates) -> compare against the
    # f32 reference with a bf16-appropriate tolerance; the max-pool branch is
    # exact f32.
    assert jnp.allclose(out, ref, atol=5e-2, rtol=5e-2), float(
        jnp.max(jnp.abs(out - ref)))

    print("KERNEL_OK")
</pallas_src>

<mosaic_0001>
module attributes {stable_mosaic.version = 11 : i64} {
  func.func @_matmul_bias_relu6_kernel(%arg0: i32, %arg1: i32, %arg2: memref<256x8xf32, #tpu.memory_space<vmem>>, %arg3: memref<8x8xbf16, #tpu.memory_space<vmem>>, %arg4: memref<1x8xf32, #tpu.memory_space<vmem>>, %arg5: memref<256x8xbf16, #tpu.memory_space<vmem>>) attributes {dimension_semantics = [#tpu.dimension_semantics<parallel>, #tpu.dimension_semantics<parallel>], iteration_bounds = array<i64: 2, 1>, scalar_prefetch = 0 : i64, scratch_operands = 0 : i64, tpu.core_type = #tpu.core_type<tc>, window_params = [{transform_indices = @transform_0, window_bounds = array<i64: 256, 8>}, {transform_indices = @transform_1, window_bounds = array<i64: 8, 8>}, {transform_indices = @transform_2, window_bounds = array<i64: 1, 8>}, {transform_indices = @transform_3, window_bounds = array<i64: 256, 8>}]} {
    %c0 = arith.constant 0 : index
    %c0_0 = arith.constant 0 : index
    %0 = vector.load %arg2[%c0, %c0_0] : memref<256x8xf32, #tpu.memory_space<vmem>>, vector<256x8xf32>
    %1 = arith.truncf %0 : vector<256x8xf32> to vector<256x8xbf16>
    %c0_1 = arith.constant 0 : index
    %c0_2 = arith.constant 0 : index
    %2 = vector.load %arg3[%c0_1, %c0_2] : memref<8x8xbf16, #tpu.memory_space<vmem>>, vector<8x8xbf16>
    %cst = arith.constant dense<0.000000e+00> : vector<256x8xf32>
    %3 = tpu.matmul %1, %2, %cst {dimension_numbers = #tpu.dot_dimension_numbers<[1], [0], [0], [1], [0, 0, 1, 1], [], []>} : vector<256x8xbf16>, vector<8x8xbf16>, vector<256x8xf32> -> vector<256x8xf32>
    %c0_3 = arith.constant 0 : index
    %c0_4 = arith.constant 0 : index
    %4 = vector.load %arg4[%c0_3, %c0_4] : memref<1x8xf32, #tpu.memory_space<vmem>>, vector<1x8xf32>
    %5 = vector.broadcast %4 : vector<1x8xf32> to vector<256x8xf32>
    %6 = arith.addf %3, %5 : vector<256x8xf32>
    %cst_5 = arith.constant 0.000000e+00 : f32
    %cst_6 = arith.constant 6.000000e+00 : f32
    %7 = vector.broadcast %cst_5 : f32 to vector<256x8xf32>
    %8 = arith.maximumf %7, %6 : vector<256x8xf32>
    %9 = vector.broadcast %cst_6 : f32 to vector<256x8xf32>
    %10 = arith.minimumf %9, %8 : vector<256x8xf32>
    %11 = arith.truncf %10 : vector<256x8xf32> to vector<256x8xbf16>
    %c0_7 = arith.constant 0 : index
    %c0_8 = arith.constant 0 : index
    %12 = vector.load %arg5[%c0_7, %c0_8] : memref<256x8xbf16, #tpu.memory_space<vmem>>, vector<256x8xbf16>
    tpu.vector_store %arg5[%c0_7, %c0_8], %11 {strides = array<i32>} : memref<256x8xbf16, #tpu.memory_space<vmem>>, vector<256x8xbf16>,
    return
  }
  func.func @transform_0(%arg0: i32, %arg1: i32) -> (i32, i32) {
    %c0_i32 = arith.constant 0 : i32
    %c0_i32_0 = arith.constant 0 : i32
    return %arg0, %c0_i32 : i32, i32
  }
  func.func @transform_1(%arg0: i32, %arg1: i32) -> (i32, i32) {
    %c0_i32 = arith.constant 0 : i32
    %c0_i32_0 = arith.constant 0 : i32
    return %c0_i32, %arg1 : i32, i32
  }
  func.func @transform_2(%arg0: i32, %arg1: i32) -> (i32, i32) {
    %c0_i32 = arith.constant 0 : i32
    %c0_i32_0 = arith.constant 0 : i32
    return %c0_i32, %arg1 : i32, i32
  }
  func.func @transform_3(%arg0: i32, %arg1: i32) -> (i32, i32) {
    %c0_i32 = arith.constant 0 : i32
    return %arg0, %arg1 : i32, i32
  }
}

module attributes {stable_mosaic.version = 11 : i64} {
  func.func @_matmul_bias_relu6_kernel(%arg0: i32, %arg1: i32, %arg2: memref<256x72xbf16, #tpu.memory_space<vmem>>, %arg3: memref<72x8xbf16, #tpu.memory_space<vmem>>, %arg4: memref<1x8xf32, #tpu.memory_space<vmem>>, %arg5: memref<256x8xbf16, #tpu.memory_space<vmem>>) attributes {dimension_semantics = [#tpu.dimension_semantics<parallel>, #tpu.dimension_semantics<parallel>], iteration_bounds = array<i64: 2, 1>, scalar_prefetch = 0 : i64, scratch_operands = 0 : i64, tpu.core_type = #tpu.core_type<tc>, window_params = [{transform_indices = @transform_0, window_bounds = array<i64: 256, 72>}, {transform_indices = @transform_1, window_bounds = array<i64: 72, 8>}, {transform_indices = @transform_2, window_bounds = array<i64: 1, 8>}, {transform_indices = @transform_3, window_bounds = array<i64: 256, 8>}]} {
    %c0 = arith.constant 0 : index
    %c0_0 = arith.constant 0 : index
    %0 = vector.load %arg2[%c0, %c0_0] : memref<256x72xbf16, #tpu.memory_space<vmem>>, vector<256x72xbf16>
    %c0_1 = arith.constant 0 : index
    %c0_2 = arith.constant 0 : index
    %1 = vector.load %arg3[%c0_1, %c0_2] : memref<72x8xbf16, #tpu.memory_space<vmem>>, vector<72x8xbf16>
    %cst = arith.constant dense<0.000000e+00> : vector<256x8xf32>
    %2 = tpu.matmul %0, %1, %cst {dimension_numbers = #tpu.dot_dimension_numbers<[1], [0], [0], [1], [0, 0, 1, 1], [], []>} : vector<256x72xbf16>, vector<72x8xbf16>, vector<256x8xf32> -> vector<256x8xf32>
    %c0_3 = arith.constant 0 : index
    %c0_4 = arith.constant 0 : index
    %3 = vector.load %arg4[%c0_3, %c0_4] : memref<1x8xf32, #tpu.memory_space<vmem>>, vector<1x8xf32>
    %4 = vector.broadcast %3 : vector<1x8xf32> to vector<256x8xf32>
    %5 = arith.addf %2, %4 : vector<256x8xf32>
    %cst_5 = arith.constant 0.000000e+00 : f32
    %cst_6 = arith.constant 6.000000e+00 : f32
    %6 = vector.broadcast %cst_5 : f32 to vector<256x8xf32>
    %7 = arith.maximumf %6, %5 : vector<256x8xf32>
    %8 = vector.broadcast %cst_6 : f32 to vector<256x8xf32>
    %9 = arith.minimumf %8, %7 : vector<256x8xf32>
    %10 = arith.truncf %9 : vector<256x8xf32> to vector<256x8xbf16>
    %c0_7 = arith.constant 0 : index
    %c0_8 = arith.constant 0 : index
    %11 = vector.load %arg5[%c0_7, %c0_8] : memref<256x8xbf16, #tpu.memory_space<vmem>>, vector<256x8xbf16>
    tpu.vector_store %arg5[%c0_7, %c0_8], %10 {strides = array<i32>} : memref<256x8xbf16, #tpu.memory_space<vmem>>, vector<256x8xbf16>,
    return
  }
  func.func @transform_0(%arg0: i32, %arg1: i32) -> (i32, i32) {
    %c0_i32 = arith.constant 0 : i32
    %c0_i32_0 = arith.constant 0 : i32
    return %arg0, %c0_i32 : i32, i32
  }
  func.func @transform_1(%arg0: i32, %arg1: i32) -> (i32, i32) {
    %c0_i32 = arith.constant 0 : i32
    %c0_i32_0 = arith.constant 0 : i32
    return %c0_i32, %arg1 : i32, i32
  }
  func.func @transform_2(%arg0: i32, %arg1: i32) -> (i32, i32) {
    %c0_i32 = arith.constant 0 : i32
    %c0_i32_0 = arith.constant 0 : i32
    return %c0_i32, %arg1 : i32, i32
  }
  func.func @transform_3(%arg0: i32, %arg1: i32) -> (i32, i32) {
    %c0_i32 = arith.constant 0 : i32
    return %arg0, %arg1 : i32, i32
  }
}

module attributes {stable_mosaic.version = 11 : i64} {
  func.func @_matmul_bias_relu6_kernel(%arg0: i32, %arg1: i32, %arg2: memref<104x72xbf16, #tpu.memory_space<vmem>>, %arg3: memref<72x8xbf16, #tpu.memory_space<vmem>>, %arg4: memref<1x8xf32, #tpu.memory_space<vmem>>, %arg5: memref<104x8xf32, #tpu.memory_space<vmem>>) attributes {dimension_semantics = [#tpu.dimension_semantics<parallel>, #tpu.dimension_semantics<parallel>], iteration_bounds = array<i64: 1, 1>, scalar_prefetch = 0 : i64, scratch_operands = 0 : i64, tpu.core_type = #tpu.core_type<tc>, window_params = [{transform_indices = @transform_0, window_bounds = array<i64: 104, 72>}, {transform_indices = @transform_1, window_bounds = array<i64: 72, 8>}, {transform_indices = @transform_2, window_bounds = array<i64: 1, 8>}, {transform_indices = @transform_3, window_bounds = array<i64: 104, 8>}]} {
    %c0 = arith.constant 0 : index
    %c0_0 = arith.constant 0 : index
    %0 = vector.load %arg2[%c0, %c0_0] : memref<104x72xbf16, #tpu.memory_space<vmem>>, vector<104x72xbf16>
    %c0_1 = arith.constant 0 : index
    %c0_2 = arith.constant 0 : index
    %1 = vector.load %arg3[%c0_1, %c0_2] : memref<72x8xbf16, #tpu.memory_space<vmem>>, vector<72x8xbf16>
    %cst = arith.constant dense<0.000000e+00> : vector<104x8xf32>
    %2 = tpu.matmul %0, %1, %cst {dimension_numbers = #tpu.dot_dimension_numbers<[1], [0], [0], [1], [0, 0, 1, 1], [], []>} : vector<104x72xbf16>, vector<72x8xbf16>, vector<104x8xf32> -> vector<104x8xf32>
    %c0_3 = arith.constant 0 : index
    %c0_4 = arith.constant 0 : index
    %3 = vector.load %arg4[%c0_3, %c0_4] : memref<1x8xf32, #tpu.memory_space<vmem>>, vector<1x8xf32>
    %4 = vector.broadcast %3 : vector<1x8xf32> to vector<104x8xf32>
    %5 = arith.addf %2, %4 : vector<104x8xf32>
    %cst_5 = arith.constant 0.000000e+00 : f32
    %cst_6 = arith.constant 6.000000e+00 : f32
    %6 = vector.broadcast %cst_5 : f32 to vector<104x8xf32>
    %7 = arith.maximumf %6, %5 : vector<104x8xf32>
    %8 = vector.broadcast %cst_6 : f32 to vector<104x8xf32>
    %9 = arith.minimumf %8, %7 : vector<104x8xf32>
    %c0_7 = arith.constant 0 : index
    %c0_8 = arith.constant 0 : index
    %10 = vector.load %arg5[%c0_7, %c0_8] : memref<104x8xf32, #tpu.memory_space<vmem>>, vector<104x8xf32>
    tpu.vector_store %arg5[%c0_7, %c0_8], %9 {strides = array<i32>} : memref<104x8xf32, #tpu.memory_space<vmem>>, vector<104x8xf32>,
    return
  }
  func.func @transform_0(%arg0: i32, %arg1: i32) -> (i32, i32) {
    %c0_i32 = arith.constant 0 : i32
    %c0_i32_0 = arith.constant 0 : i32
    return %arg0, %c0_i32 : i32, i32
  }
  func.func @transform_1(%arg0: i32, %arg1: i32) -> (i32, i32) {
    %c0_i32 = arith.constant 0 : i32
    %c0_i32_0 = arith.constant 0 : i32
    return %c0_i32, %arg1 : i32, i32
  }
  func.func @transform_2(%arg0: i32, %arg1: i32) -> (i32, i32) {
    %c0_i32 = arith.constant 0 : i32
    %c0_i32_0 = arith.constant 0 : i32
    return %c0_i32, %arg1 : i32, i32
  }
  func.func @transform_3(%arg0: i32, %arg1: i32) -> (i32, i32) {
    %c0_i32 = arith.constant 0 : i32
    return %arg0, %arg1 : i32, i32
  }
}

module attributes {stable_mosaic.version = 11 : i64} {
  func.func @_branch2_pool_kernel(%arg0: i32, %arg1: memref<104x72xf32, #tpu.memory_space<vmem>>, %arg2: memref<72x8xbf16, #tpu.memory_space<vmem>>, %arg3: memref<1x8xf32, #tpu.memory_space<vmem>>, %arg4: memref<104x8xf32, #tpu.memory_space<vmem>>, %arg5: memref<104x8xf32, #tpu.memory_space<vmem>>) attributes {dimension_semantics = [#tpu.dimension_semantics<parallel>], iteration_bounds = array<i64: 1>, scalar_prefetch = 0 : i64, scratch_operands = 0 : i64, tpu.core_type = #tpu.core_type<tc>, window_params = [{transform_indices = @transform_0, window_bounds = array<i64: 104, 72>}, {pipeline_mode = #tpu.pipeline_mode<synchronous>, transform_indices = @transform_1, window_bounds = array<i64: 72, 8>}, {pipeline_mode = #tpu.pipeline_mode<synchronous>, transform_indices = @transform_2, window_bounds = array<i64: 1, 8>}, {transform_indices = @transform_3, window_bounds = array<i64: 104, 8>}, {transform_indices = @transform_4, window_bounds = array<i64: 104, 8>}]} {
    %c0 = arith.constant 0 : index
    %c0_0 = arith.constant 0 : index
    %0 = vector.load %arg1[%c0, %c0_0] : memref<104x72xf32, #tpu.memory_space<vmem>>, vector<104x72xf32>
    %1 = arith.truncf %0 : vector<104x72xf32> to vector<104x72xbf16>
    %c0_1 = arith.constant 0 : index
    %c0_2 = arith.constant 0 : index
    %2 = vector.load %arg2[%c0_1, %c0_2] : memref<72x8xbf16, #tpu.memory_space<vmem>>, vector<72x8xbf16>
    %cst = arith.constant dense<0.000000e+00> : vector<104x8xf32>
    %3 = tpu.matmul %1, %2, %cst {dimension_numbers = #tpu.dot_dimension_numbers<[1], [0], [0], [1], [0, 0, 1, 1], [], []>} : vector<104x72xbf16>, vector<72x8xbf16>, vector<104x8xf32> -> vector<104x8xf32>
    %c0_3 = arith.constant 0 : index
    %c0_4 = arith.constant 0 : index
    %4 = vector.load %arg3[%c0_3, %c0_4] : memref<1x8xf32, #tpu.memory_space<vmem>>, vector<1x8xf32>
    %5 = vector.broadcast %4 : vector<1x8xf32> to vector<104x8xf32>
    %6 = arith.addf %3, %5 : vector<104x8xf32>
    %cst_5 = arith.constant 0.000000e+00 : f32
    %cst_6 = arith.constant 6.000000e+00 : f32
    %7 = vector.broadcast %cst_5 : f32 to vector<104x8xf32>
    %8 = arith.maximumf %7, %6 : vector<104x8xf32>
    %9 = vector.broadcast %cst_6 : f32 to vector<104x8xf32>
    %10 = arith.minimumf %9, %8 : vector<104x8xf32>
    %c0_7 = arith.constant 0 : index
    %c0_8 = arith.constant 0 : index
    %11 = vector.load %arg4[%c0_7, %c0_8] : memref<104x8xf32, #tpu.memory_space<vmem>>, vector<104x8xf32>
    tpu.vector_store %arg4[%c0_7, %c0_8], %10 {strides = array<i32>} : memref<104x8xf32, #tpu.memory_space<vmem>>, vector<104x8xf32>,
    %12 = vector.extract_strided_slice %0 {offsets = [0, 0], sizes = [104, 8], strides = [1, 1]} : vector<104x72xf32> to vector<104x8xf32>
    %13 = vector.extract_strided_slice %0 {offsets = [0, 8], sizes = [104, 8], strides = [1, 1]} : vector<104x72xf32> to vector<104x8xf32>
    %14 = arith.maximumf %12, %13 : vector<104x8xf32>
    %15 = vector.extract_strided_slice %0 {offsets = [0, 16], sizes = [104, 8], strides = [1, 1]} : vector<104x72xf32> to vector<104x8xf32>
    %16 = arith.maximumf %14, %15 : vector<104x8xf32>
    %17 = vector.extract_strided_slice %0 {offsets = [0, 24], sizes = [104, 8], strides = [1, 1]} : vector<104x72xf32> to vector<104x8xf32>
    %18 = arith.maximumf %16, %17 : vector<104x8xf32>
    %19 = vector.extract_strided_slice %0 {offsets = [0, 32], sizes = [104, 8], strides = [1, 1]} : vector<104x72xf32> to vector<104x8xf32>
    %20 = arith.maximumf %18, %19 : vector<104x8xf32>
    %21 = vector.extract_strided_slice %0 {offsets = [0, 40], sizes = [104, 8], strides = [1, 1]} : vector<104x72xf32> to vector<104x8xf32>
    %22 = arith.maximumf %20, %21 : vector<104x8xf32>
    %23 = vector.extract_strided_slice %0 {offsets = [0, 48], sizes = [104, 8], strides = [1, 1]} : vector<104x72xf32> to vector<104x8xf32>
    %24 = arith.maximumf %22, %23 : vector<104x8xf32>
    %25 = vector.extract_strided_slice %0 {offsets = [0, 56], sizes = [104, 8], strides = [1, 1]} : vector<104x72xf32> to vector<104x8xf32>
    %26 = arith.maximumf %24, %25 : vector<104x8xf32>
    %27 = vector.extract_strided_slice %0 {offsets = [0, 64], sizes = [104, 8], strides = [1, 1]} : vector<104x72xf32> to vector<104x8xf32>
    %28 = arith.maximumf %26, %27 : vector<104x8xf32>
    %c0_9 = arith.constant 0 : index
    %c0_10 = arith.constant 0 : index
    %29 = vector.load %arg5[%c0_9, %c0_10] : memref<104x8xf32, #tpu.memory_space<vmem>>, vector<104x8xf32>
    tpu.vector_store %arg5[%c0_9, %c0_10], %28 {strides = array<i32>} : memref<104x8xf32, #tpu.memory_space<vmem>>, vector<104x8xf32>,
    return
  }
  func.func @transform_0(%arg0: i32) -> (i32, i32) {
    %c0_i32 = arith.constant 0 : i32
    %c0_i32_0 = arith.constant 0 : i32
    return %arg0, %c0_i32 : i32, i32
  }
  func.func @transform_1(%arg0: i32) -> (i32, i32) {
    %c0_i32 = arith.constant 0 : i32
    %c0_i32_0 = arith.constant 0 : i32
    %c0_i32_1 = arith.constant 0 : i32
    return %c0_i32, %c0_i32_0 : i32, i32
  }
  func.func @transform_2(%arg0: i32) -> (i32, i32) {
    %c0_i32 = arith.constant 0 : i32
    %c0_i32_0 = arith.constant 0 : i32
    %c0_i32_1 = arith.constant 0 : i32
    return %c0_i32, %c0_i32_0 : i32, i32
  }
  func.func @transform_3(%arg0: i32) -> (i32, i32) {
    %c0_i32 = arith.constant 0 : i32
    %c0_i32_0 = arith.constant 0 : i32
    return %arg0, %c0_i32 : i32, i32
  }
  func.func @transform_4(%arg0: i32) -> (i32, i32) {
    %c0_i32 = arith.constant 0 : i32
    %c0_i32_0 = arith.constant 0 : i32
    return %arg0, %c0_i32 : i32, i32
  }
}

</mosaic_0001>

<llo_original>
// kernel: reduction_a_forward.5
$region0: #{reduction_a_forward.5}
  #allocation0 [shape = 'u32[]', space=smem, size = 0x4, offset = 0x4, fixed_abs, tag = 'smem constant byte address 0x4 - core index']
  #allocation1 [shape = 'u32[72,128]{1,0:T(1,128)}', space=vmem, size = 0x9000, scoped, tag = 'internal scratch']
  %s0 = inlined_call_operand.vmem [shape: f32[512,8], index: 0, kind: input, shape index: {}]
  %s1 = inlined_call_operand.vmem [shape: bf16[8,8], index: 1, kind: input, shape index: {}]
  %s2 = inlined_call_operand.vmem [shape: f32[1,8], index: 2, kind: input, shape index: {}]
  %s3 = inlined_call_operand.vmem [shape: bf16[512,8], index: 3, kind: output, shape index: {}]
  %s4 = sld [smem:[#allocation0]]
  $region45: #{reduction_a_forward.5} parent=0
    _
  %s6 = ssub.s32 1, %s4
  %s7 = scalar_select 0, %s6, %s4
  loop: start=0, step=1, limit=4
  $region2: #{reduction_a_forward.5} parent=0 // loop_pre_header
    _
  $region3: #{reduction_a_forward.5} parent=0 // loop_header
    %s9 = sphi 0, %s13
    %p10 = scmp.ge.s32.totalorder %s9, 4
    %s16 = sphi 0, %s28
    %s17 = sphi 0, %s24
    %s18 = sphi 0, %s16
    %s19 = sphi 0, %s17
    %s20 = sphi 0, %s18
    %s21 = sphi 0, %s19
    %s31 = sphi 0, %s33
    %s34 = sphi 0, %s31
    %s35 = sphi 0, %s34
    %s51 = sphi 0, %s35
    %s57 = sphi 0, %s59
    %s60 = sphi 0, %s57
    %s61 = sphi 0, %s60
    %s77 = sphi 0, %s61
    %s83 = sphi 0, %s85
    %s86 = sphi 0, %s83
    %s87 = sphi 0, %s86
    %s103 = sphi 0, %s87
    %s111 = sphi 0, %s113
    %s114 = sphi 0, %s111
    %s115 = sphi 0, %s114
    %s131 = sphi 0, %s115
  $region4: #{reduction_a_forward.5} parent=0 // loop_header_branch
    %12 = sbr.rel (%p10) target = $region8
  $region5: #{reduction_a_forward.5} parent=0 // loop_body
    %s14 = ssub.s32 %s9, 1
    %s15 = ssub.s32 %s9, 2
    %s22 = sadd.s32 1, %s17
    %p23 = scmp.ge.s32.totalorder %s22, 1
    %s24 = scalar_select %p23, 0, %s22
    %s25 = sadd.s32 1, %s16
    %s26 = scalar_select %p23, %s25, %s16
    %p27 = scmp.ge.s32.totalorder %s26, 2
    %s28 = scalar_select %p27, 0, %s26
    %s29 = ssub.s32 %s16, %s28
    %p30 = scmp.eq.s32.totalorder %s29, 0
    %s32 = sadd.s32 %s31, 1
    %s33 = scalar_select %p30, %s31, %s32
    %p36 = pneg %p30
    %p37 = scmp.eq.s32.totalorder %s9, 1
    %p38 = por %p36, %p37
    %p39 = scmp.ne.s32.totalorder %s31, %s34
    %p40 = scmp.eq.s32.totalorder %s9, 0
    %p41 = por %p39, %p40
    %p42 = scmp.ne.s32.totalorder %s31, %s34
    %p43 = scmp.eq.s32.totalorder %s14, 1
    %p44 = por %p42, %p43
    %p45 = scmp.ne.s32.totalorder %s34, %s35
    %p46 = scmp.eq.s32.totalorder %s14, 0
    %p47 = por %p45, %p46
    %p48 = scmp.ne.s32.totalorder %s34, %s35
    %p49 = scmp.eq.s32.totalorder %s15, 1
    %p50 = por %p48, %p49
    %p52 = scmp.ne.s32.totalorder %s35, %s51
    %p53 = scmp.eq.s32.totalorder %s15, 0
    %p54 = por %p52, %p53
    %s55 = ssub.s32 %s17, %s24
    %p56 = scmp.eq.s32.totalorder %s55, 0
    %s58 = sadd.s32 %s57, 1
    %s59 = scalar_select %p56, %s57, %s58
    %p62 = pneg %p56
    %p63 = scmp.eq.s32.totalorder %s9, 1
    %p64 = por %p62, %p63
    %p65 = scmp.ne.s32.totalorder %s57, %s60
    %p66 = scmp.eq.s32.totalorder %s9, 0
    %p67 = por %p65, %p66
    %p68 = scmp.ne.s32.totalorder %s57, %s60
    %p69 = scmp.eq.s32.totalorder %s14, 1
    %p70 = por %p68, %p69
    %p71 = scmp.ne.s32.totalorder %s60, %s61
    %p72 = scmp.eq.s32.totalorder %s14, 0
    %p73 = por %p71, %p72
    %p74 = scmp.ne.s32.totalorder %s60, %s61
    %p75 = scmp.eq.s32.totalorder %s15, 1
    %p76 = por %p74, %p75
    %p78 = scmp.ne.s32.totalorder %s61, %s77
    %p79 = scmp.eq.s32.totalorder %s15, 0
    %p80 = por %p78, %p79
    %s81 = ssub.s32 %s17, %s24
    %p82 = scmp.eq.s32.totalorder %s81, 0
    %s84 = sadd.s32 %s83, 1
    %s85 = scalar_select %p82, %s83, %s84
    %p88 = pneg %p82
    %p89 = scmp.eq.s32.totalorder %s9, 1
    %p90 = por %p88, %p89
    %p91 = scmp.ne.s32.totalorder %s83, %s86
    %p92 = scmp.eq.s32.totalorder %s9, 0
    %p93 = por %p91, %p92
    %p94 = scmp.ne.s32.totalorder %s83, %s86
    %p95 = scmp.eq.s32.totalorder %s14, 1
    %p96 = por %p94, %p95
    %p97 = scmp.ne.s32.totalorder %s86, %s87
    %p98 = scmp.eq.s32.totalorder %s14, 0
    %p99 = por %p97, %p98
    %p100 = scmp.ne.s32.totalorder %s86, %s87
    %p101 = scmp.eq.s32.totalorder %s15, 1
    %p102 = por %p100, %p101
    %p104 = scmp.ne.s32.totalorder %s87, %s103
    %p105 = scmp.eq.s32.totalorder %s15, 0
    %p106 = por %p104, %p105
    %s107 = ssub.s32 %s16, %s28
    %s108 = ssub.s32 %s17, %s24
    %s109 = sor.u32 %s107, %s108
    %p110 = scmp.eq.s32.totalorder %s109, 0
    %s112 = sadd.s32 %s111, 1
    %s113 = scalar_select %p110, %s111, %s112
    %p116 = pneg %p110
    %p117 = scmp.eq.s32.totalorder %s9, 1
    %p118 = por %p116, %p117
    %p119 = scmp.ne.s32.totalorder %s111, %s114
    %p120 = scmp.eq.s32.totalorder %s9, 0
    %p121 = por %p119, %p120
    %p122 = scmp.ne.s32.totalorder %s111, %s114
    %p123 = scmp.eq.s32.totalorder %s14, 1
    %p124 = por %p122, %p123
    %p125 = scmp.ne.s32.totalorder %s114, %s115
    %p126 = scmp.eq.s32.totalorder %s14, 0
    %p127 = por %p125, %p126
    %p128 = scmp.ne.s32.totalorder %s114, %s115
    %p129 = scmp.eq.s32.totalorder %s15, 1
    %p130 = por %p128, %p129
    %p132 = scmp.ne.s32.totalorder %s115, %s131
    %p133 = scmp.eq.s32.totalorder %s15, 0
    %p134 = por %p132, %p133
    %p135 = scmp.le.s32.totalorder 1, %s9
    %p136 = scmp.lt.s32.totalorder %s9, 3
    %p137 = pnand %p135, %p136
    %p138 = pneg %p137
    // Predicated region
    $region9: #{reduction_a_forward.5} parent=5 // pred_check
      _
    $region10: #{reduction_a_forward.5} parent=5 // pred_check_branch
      %140 = sbr.rel (%p137) target = $region12
    $region11: #{reduction_a_forward.5} parent=5 // pred_region
      %s141 = ssub.s32 %s9, 1
      // Predicated region
      $region13: #{reduction_a_forward.5} parent=11 // pred_check
        %p142 = pneg %p73
      $region14: #{reduction_a_forward.5} parent=11 // pred_check_branch
        %144 = sbr.rel (%p142) target = $region16
      $region15: #{reduction_a_forward.5} parent=11 // pred_region
        %p145 = scmp.lt.s32.totalorder %s19, 0
        %s146 = scalar_select %p145, %s19, 0
        %s147 = smul.addr %s146, 4
        %s148 = scalar_lea.vmem %s1, %s147
      $region16: #{reduction_a_forward.5} parent=11 // pred_fallthru
        _
      // Predicated region
      $region17: #{reduction_a_forward.5} parent=11 // pred_check
        %p149 = pneg %p99
      $region18: #{reduction_a_forward.5} parent=11 // pred_check_branch
        %151 = sbr.rel (%p149) target = $region20
      $region19: #{reduction_a_forward.5} parent=11 // pred_region
        %p152 = scmp.lt.s32.totalorder %s19, 0
        %s153 = scalar_select %p152, %s19, 0
        %s154 = scalar_lea.vmem %s2, %s153
      $region20: #{reduction_a_forward.5} parent=11 // pred_fallthru
        _
    $region12: #{reduction_a_forward.5} parent=5 // pred_fallthru
      _
    %p155 = scmp.lt.s32.totalorder %s9, 2
    // Predicated region
    $region21: #{reduction_a_forward.5} parent=5 // pred_check
      %p156 = pneg %p155
    $region22: #{reduction_a_forward.5} parent=5 // pred_check_branch
      %158 = sbr.rel (%p156) target = $region24
    $region23: #{reduction_a_forward.5} parent=5 // pred_region
      // Predicated region
      $region25: #{reduction_a_forward.5} parent=23 // pred_check
        %p159 = pneg %p41
      $region26: #{reduction_a_forward.5} parent=23 // pred_check_branch
        %161 = sbr.rel (%p159) target = $region28
      $region27: #{reduction_a_forward.5} parent=23 // pred_region
        %s162 = smul.u32 32, %s16
        %p163 = scmp.lt.s32.totalorder %s162, 63
        %s164 = scalar_select %p163, %s162, 63
        %s165 = smul.addr %s164, 8
        %s166 = scalar_lea.vmem %s0, %s165
        %s167 = smul.u32 32, %s16
      $region28: #{reduction_a_forward.5} parent=23 // pred_fallthru
        _
    $region24: #{reduction_a_forward.5} parent=5 // pred_fallthru
      _
    %p168 = scmp.le.s32.totalorder 1, %s9
    %p169 = scmp.lt.s32.totalorder %s9, 3
    %p170 = pnand %p168, %p169
    %p171 = pneg %p170
    // Predicated region
    $region29: #{reduction_a_forward.5} parent=5 // pred_check
      _
    $region30: #{reduction_a_forward.5} parent=5 // pred_check_branch
      %173 = sbr.rel (%p170) target = $region32
    $region31: #{reduction_a_forward.5} parent=5 // pred_region
      %s174 = ssub.s32 %s9, 1
      %s175 = smul.u32 32, %s18
      %p176 = scmp.lt.s32.totalorder %s175, 63
      %s177 = scalar_select %p176, %s175, 63
      %s178 = smul.addr %s177, 8
      %s179 = scalar_lea.vmem %s0, %s178
      %p180 = pneg %p47
      %p181 = pneg %p44
      %p182 = scmp.lt.s32.totalorder %s19, 0
      %s183 = scalar_select %p182, %s19, 0
      %s184 = smul.addr %s183, 4
      %s185 = scalar_lea.vmem %s1, %s184
      %p186 = pneg %p73
      %p187 = pneg %p70
      %p188 = scmp.lt.s32.totalorder %s19, 0
      %s189 = scalar_select %p188, %s19, 0
      %s190 = scalar_lea.vmem %s2, %s189
      %p191 = pneg %p99
      %p192 = pneg %p96
      %p193 = pneg %p127
      %p194 = pneg %p124
      %s195 = smul.u32 32, %s18
      %p196 = scmp.lt.s32.totalorder %s195, 63
      %s197 = scalar_select %p196, %s195, 63
      %p198 = scmp.lt.s32.totalorder %s19, 0
      %s199 = scalar_select %p198, %s19, 0
      %s200 = sadd.s32 %s199, %s197
      %s201 = smul.addr %s200, 4
      %s202 = scalar_lea.vmem %s3, %s201
      %s203 = smul.u32 32, %s18
      %p204 = scmp.lt.s32.totalorder %s203, 63
      %s205 = scalar_select %p204, %s203, 63
      %s206 = smul.addr %s205, 8
      %s207 = scalar_lea.vmem %s0, %s206
      %s208 = smul.u32 32, %s18
      %p209 = scmp.lt.s32.totalorder %s19, 0
      %s210 = scalar_select %p209, %s19, 0
      %s211 = smul.addr %s210, 4
      %s212 = scalar_lea.vmem %s1, %s211
      %p213 = scmp.lt.s32.totalorder %s19, 0
      %s214 = scalar_select %p213, %s19, 0
      %s215 = scalar_lea.vmem %s2, %s214
      %s216 = smul.u32 32, %s18
      %p217 = scmp.lt.s32.totalorder %s216, 63
      %s218 = scalar_select %p217, %s216, 63
      %p219 = scmp.lt.s32.totalorder %s19, 0
      %s220 = scalar_select %p219, %s19, 0
      %s221 = sadd.s32 %s220, %s218
      %s222 = smul.addr %s221, 4
      %s223 = scalar_lea.vmem %s3, %s222
      %s224 = smul.u32 32, %s18
      %v226 = vld [vmem:[%s207] sm:$0xff]
      %v227 = vld [vmem:[%s207 + $0x8] sm:$0xff]
      %v228 = vld [vmem:[%s207 + $0x10] sm:$0xff]
      %v229 = vld [vmem:[%s207 + $0x18] sm:$0xff]
      %v230 = vld [vmem:[%s207 + $0x20] sm:$0xff]
      %v231 = vld [vmem:[%s207 + $0x28] sm:$0xff]
      %v232 = vld [vmem:[%s207 + $0x30] sm:$0xff]
      %v233 = vld [vmem:[%s207 + $0x38] sm:$0xff]
      %v234 = vld [vmem:[%s207 + $0x40] sm:$0xff]
      %v235 = vld [vmem:[%s207 + $0x48] sm:$0xff]
      %v236 = vld [vmem:[%s207 + $0x50] sm:$0xff]
      %v237 = vld [vmem:[%s207 + $0x58] sm:$0xff]
      %v238 = vld [vmem:[%s207 + $0x60] sm:$0xff]
      %v239 = vld [vmem:[%s207 + $0x68] sm:$0xff]
      %v240 = vld [vmem:[%s207 + $0x70] sm:$0xff]
      %v241 = vld [vmem:[%s207 + $0x78] sm:$0xff]
      %v242 = vld [vmem:[%s207 + $0x80] sm:$0xff]
      %v243 = vld [vmem:[%s207 + $0x88] sm:$0xff]
      %v244 = vld [vmem:[%s207 + $0x90] sm:$0xff]
      %v245 = vld [vmem:[%s207 + $0x98] sm:$0xff]
      %v246 = vld [vmem:[%s207 + $0xa0] sm:$0xff]
      %v247 = vld [vmem:[%s207 + $0xa8] sm:$0xff]
      %v248 = vld [vmem:[%s207 + $0xb0] sm:$0xff]
      %v249 = vld [vmem:[%s207 + $0xb8] sm:$0xff]
      %v250 = vld [vmem:[%s207 + $0xc0] sm:$0xff]
      %v251 = vld [vmem:[%s207 + $0xc8] sm:$0xff]
      %v252 = vld [vmem:[%s207 + $0xd0] sm:$0xff]
      %v253 = vld [vmem:[%s207 + $0xd8] sm:$0xff]
      %v254 = vld [vmem:[%s207 + $0xe0] sm:$0xff]
      %v255 = vld [vmem:[%s207 + $0xe8] sm:$0xff]
      %v256 = vld [vmem:[%s207 + $0xf0] sm:$0xff]
      %v257 = vld [vmem:[%s207 + $0xf8] sm:$0xff]
      %v258 = vpack.c.bf16 %v227, %v226
      %v259 = vpack.c.bf16 %v229, %v228
      %v260 = vpack.c.bf16 %v231, %v230
      %v261 = vpack.c.bf16 %v233, %v232
      %v262 = vpack.c.bf16 %v235, %v234
      %v263 = vpack.c.bf16 %v237, %v236
      %v264 = vpack.c.bf16 %v239, %v238
      %v265 = vpack.c.bf16 %v241, %v240
      %v266 = vpack.c.bf16 %v243, %v242
      %v267 = vpack.c.bf16 %v245, %v244
      %v268 = vpack.c.bf16 %v247, %v246
      %v269 = vpack.c.bf16 %v249, %v248
      %v270 = vpack.c.bf16 %v251, %v250
      %v271 = vpack.c.bf16 %v253, %v252
      %v272 = vpack.c.bf16 %v255, %v254
      %v273 = vpack.c.bf16 %v257, %v256
      %v274 = vld [vmem:[%s212] sm:$0xf]
      %v275 = vld [vmem:[%s215] sm:$0x1]
      %v277 = vperm.slane %v275, 0
      %vm279 = vcmask 64512
      %v281 = vsel %vm279, %v258, 0
      %v284 = vsel %vm279, %v259, 0
      %v287 = vsel %vm279, %v260, 0
      %v290 = vsel %vm279, %v261, 0
      %v293 = vsel %vm279, %v262, 0
      %v296 = vsel %vm279, %v263, 0
      %v299 = vsel %vm279, %v264, 0
      %v302 = vsel %vm279, %v265, 0
      %v305 = vsel %vm279, %v266, 0
      %v308 = vsel %vm279, %v267, 0
      %v311 = vsel %vm279, %v268, 0
      %v314 = vsel %vm279, %v269, 0
      %v317 = vsel %vm279, %v270, 0
      %v320 = vsel %vm279, %v271, 0
      %v323 = vsel %vm279, %v272, 0
      %v326 = vsel %vm279, %v273, 0
      %vm328 = vcmask 1043456
      %v330 = vsel %vm328, %v274, 0
      %332 = vmatpush.bf16.msra.mxu0 0
      %333 = vmatpush.bf16.msra.mxu0 0
      %334 = vmatpush.bf16.msra.mxu0 0
      %335 = vmatpush.bf16.msra.mxu0 0
      %336 = vmatpush.bf16.msra.mxu0 0
      %337 = vmatpush.bf16.msra.mxu0 0
      %338 = vmatpush.bf16.msra.mxu0 0
      %339 = vmatpush.bf16.msra.mxu0 %v330
      %340 = vmatmul.bf16.gmra.mxu0 %v281
      %v341 = vpop.f32.mrf.mxu0
      %v342 = vadd.f32 %v277, %v341
      %v343 = vpop.f32.mrf.mxu0
      %v344 = vadd.f32 %v277, %v343
      %345 = vmatmul.bf16.gmra.mxu0 %v284
      %v346 = vpop.f32.mrf.mxu0
      %v347 = vadd.f32 %v277, %v346
      %v348 = vpop.f32.mrf.mxu0
      %v349 = vadd.f32 %v277, %v348
      %350 = vmatmul.bf16.gmra.mxu0 %v287
      %v351 = vpop.f32.mrf.mxu0
      %v352 = vadd.f32 %v277, %v351
      %v353 = vpop.f32.mrf.mxu0
      %v354 = vadd.f32 %v277, %v353
      %355 = vmatmul.bf16.gmra.mxu0 %v290
      %v356 = vpop.f32.mrf.mxu0
      %v357 = vadd.f32 %v277, %v356
      %v358 = vpop.f32.mrf.mxu0
      %v359 = vadd.f32 %v277, %v358
      %360 = vmatmul.bf16.gmra.mxu0 %v293
      %v361 = vpop.f32.mrf.mxu0
      %v362 = vadd.f32 %v277, %v361
      %v363 = vpop.f32.mrf.mxu0
      %v364 = vadd.f32 %v277, %v363
      %365 = vmatmul.bf16.gmra.mxu0 %v296
      %v366 = vpop.f32.mrf.mxu0
      %v367 = vadd.f32 %v277, %v366
      %v368 = vpop.f32.mrf.mxu0
      %v369 = vadd.f32 %v277, %v368
      %370 = vmatmul.bf16.gmra.mxu0 %v299
      %v371 = vpop.f32.mrf.mxu0
      %v372 = vadd.f32 %v277, %v371
      %v373 = vpop.f32.mrf.mxu0
      %v374 = vadd.f32 %v277, %v373
      %375 = vmatmul.bf16.gmra.mxu0 %v302
      %v376 = vpop.f32.mrf.mxu0
      %v377 = vadd.f32 %v277, %v376
      %v378 = vpop.f32.mrf.mxu0
      %v379 = vadd.f32 %v277, %v378
      %380 = vmatmul.bf16.gmra.mxu0 %v305
      %v381 = vpop.f32.mrf.mxu0
      %v382 = vadd.f32 %v277, %v381
      %v383 = vpop.f32.mrf.mxu0
      %v384 = vadd.f32 %v277, %v383
      %385 = vmatmul.bf16.gmra.mxu0 %v308
      %v386 = vpop.f32.mrf.mxu0
      %v387 = vadd.f32 %v277, %v386
      %v388 = vpop.f32.mrf.mxu0
      %v389 = vadd.f32 %v277, %v388
      %390 = vmatmul.bf16.gmra.mxu0 %v311
      %v391 = vpop.f32.mrf.mxu0
      %v392 = vadd.f32 %v277, %v391
      %v393 = vpop.f32.mrf.mxu0
      %v394 = vadd.f32 %v277, %v393
      %395 = vmatmul.bf16.gmra.mxu0 %v314
      %v396 = vpop.f32.mrf.mxu0
      %v397 = vadd.f32 %v277, %v396
      %v398 = vpop.f32.mrf.mxu0
      %v399 = vadd.f32 %v277, %v398
      %400 = vmatmul.bf16.gmra.mxu0 %v317
      %v401 = vpop.f32.mrf.mxu0
      %v402 = vadd.f32 %v277, %v401
      %v403 = vpop.f32.mrf.mxu0
      %v404 = vadd.f32 %v277, %v403
      %405 = vmatmul.bf16.gmra.mxu0 %v320
      %v406 = vpop.f32.mrf.mxu0
      %v407 = vadd.f32 %v277, %v406
      %v408 = vpop.f32.mrf.mxu0
      %v409 = vadd.f32 %v277, %v408
      %410 = vmatmul.bf16.gmra.mxu0 %v323
      %v411 = vpop.f32.mrf.mxu0
      %v412 = vadd.f32 %v277, %v411
      %v413 = vpop.f32.mrf.mxu0
      %v414 = vadd.f32 %v277, %v413
      %415 = vmatmul.bf16.gmra.mxu0 %v326
      %v416 = vpop.f32.mrf.mxu0
      %v417 = vadd.f32 %v277, %v416
      %v418 = vpop.f32.mrf.mxu0
      %v419 = vadd.f32 %v277, %v418
      %420 = vdwg.mxu0
      %v421 = vmax.f32 %v342, 0.0
      %v422 = vmax.f32 %v344, 0.0
      %v423 = vmax.f32 %v347, 0.0
      %v424 = vmax.f32 %v349, 0.0
      %v425 = vmax.f32 %v352, 0.0
      %v426 = vmax.f32 %v354, 0.0
      %v427 = vmax.f32 %v357, 0.0
      %v428 = vmax.f32 %v359, 0.0
      %v429 = vmax.f32 %v362, 0.0
      %v430 = vmax.f32 %v364, 0.0
      %v431 = vmax.f32 %v367, 0.0
      %v432 = vmax.f32 %v369, 0.0
      %v433 = vmax.f32 %v372, 0.0
      %v434 = vmax.f32 %v374, 0.0
      %v435 = vmax.f32 %v377, 0.0
      %v436 = vmax.f32 %v379, 0.0
      %v437 = vmax.f32 %v382, 0.0
      %v438 = vmax.f32 %v384, 0.0
      %v439 = vmax.f32 %v387, 0.0
      %v440 = vmax.f32 %v389, 0.0
      %v441 = vmax.f32 %v392, 0.0
      %v442 = vmax.f32 %v394, 0.0
      %v443 = vmax.f32 %v397, 0.0
      %v444 = vmax.f32 %v399, 0.0
      %v445 = vmax.f32 %v402, 0.0
      %v446 = vmax.f32 %v404, 0.0
      %v447 = vmax.f32 %v407, 0.0
      %v448 = vmax.f32 %v409, 0.0
      %v449 = vmax.f32 %v412, 0.0
      %v450 = vmax.f32 %v414, 0.0
      %v451 = vmax.f32 %v417, 0.0
      %v452 = vmax.f32 %v419, 0.0
      %v453 = vmin.f32 %v421, 6.0
      %v454 = vmin.f32 %v422, 6.0
      %v455 = vmin.f32 %v423, 6.0
      %v456 = vmin.f32 %v424, 6.0
      %v457 = vmin.f32 %v425, 6.0
      %v458 = vmin.f32 %v426, 6.0
      %v459 = vmin.f32 %v427, 6.0
      %v460 = vmin.f32 %v428, 6.0
      %v461 = vmin.f32 %v429, 6.0
      %v462 = vmin.f32 %v430, 6.0
      %v463 = vmin.f32 %v431, 6.0
      %v464 = vmin.f32 %v432, 6.0
      %v465 = vmin.f32 %v433, 6.0
      %v466 = vmin.f32 %v434, 6.0
      %v467 = vmin.f32 %v435, 6.0
      %v468 = vmin.f32 %v436, 6.0
      %v469 = vmin.f32 %v437, 6.0
      %v470 = vmin.f32 %v438, 6.0
      %v471 = vmin.f32 %v439, 6.0
      %v472 = vmin.f32 %v440, 6.0
      %v473 = vmin.f32 %v441, 6.0
      %v474 = vmin.f32 %v442, 6.0
      %v475 = vmin.f32 %v443, 6.0
      %v476 = vmin.f32 %v444, 6.0
      %v477 = vmin.f32 %v445, 6.0
      %v478 = vmin.f32 %v446, 6.0
      %v479 = vmin.f32 %v447, 6.0
      %v480 = vmin.f32 %v448, 6.0
      %v481 = vmin.f32 %v449, 6.0
      %v482 = vmin.f32 %v450, 6.0
      %v483 = vmin.f32 %v451, 6.0
      %v484 = vmin.f32 %v452, 6.0
      %v485 = vpack.c.bf16 %v453, %v453
      %v486 = vpack.c.bf16 %v454, %v454
      %v487 = vpack.c.bf16 %v455, %v455
      %v488 = vpack.c.bf16 %v456, %v456
      %v489 = vpack.c.bf16 %v457, %v457
      %v490 = vpack.c.bf16 %v458, %v458
      %v491 = vpack.c.bf16 %v459, %v459
      %v492 = vpack.c.bf16 %v460, %v460
      %v493 = vpack.c.bf16 %v461, %v461
      %v494 = vpack.c.bf16 %v462, %v462
      %v495 = vpack.c.bf16 %v463, %v463
      %v496 = vpack.c.bf16 %v464, %v464
      %v497 = vpack.c.bf16 %v465, %v465
      %v498 = vpack.c.bf16 %v466, %v466
      %v499 = vpack.c.bf16 %v467, %v467
      %v500 = vpack.c.bf16 %v468, %v468
      %v501 = vpack.c.bf16 %v469, %v469
      %v502 = vpack.c.bf16 %v470, %v470
      %v503 = vpack.c.bf16 %v471, %v471
      %v504 = vpack.c.bf16 %v472, %v472
      %v505 = vpack.c.bf16 %v473, %v473
      %v506 = vpack.c.bf16 %v474, %v474
      %v507 = vpack.c.bf16 %v475, %v475
      %v508 = vpack.c.bf16 %v476, %v476
      %v509 = vpack.c.bf16 %v477, %v477
      %v510 = vpack.c.bf16 %v478, %v478
      %v511 = vpack.c.bf16 %v479, %v479
      %v512 = vpack.c.bf16 %v480, %v480
      %v513 = vpack.c.bf16 %v481, %v481
      %v514 = vpack.c.bf16 %v482, %v482
      %v515 = vpack.c.bf16 %v483, %v483
      %v516 = vpack.c.bf16 %v484, %v484
      %vm517 = vcmask 60416
      %518 = vst.msk [vmem:[%s223] sm:$0xf] %vm517, %v485
      %519 = vst.msk [vmem:[%s223 + $0x4] sm:$0xf] %vm517, %v486
      %520 = vst.msk [vmem:[%s223 + $0x8] sm:$0xf] %vm517, %v487
      %521 = vst.msk [vmem:[%s223 + $0xc] sm:$0xf] %vm517, %v488
      %522 = vst.msk [vmem:[%s223 + $0x10] sm:$0xf] %vm517, %v489
      %523 = vst.msk [vmem:[%s223 + $0x14] sm:$0xf] %vm517, %v490
      %524 = vst.msk [vmem:[%s223 + $0x18] sm:$0xf] %vm517, %v491
      %525 = vst.msk [vmem:[%s223 + $0x1c] sm:$0xf] %vm517, %v492
      %526 = vst.msk [vmem:[%s223 + $0x20] sm:$0xf] %vm517, %v493
      %527 = vst.msk [vmem:[%s223 + $0x24] sm:$0xf] %vm517, %v494
      %528 = vst.msk [vmem:[%s223 + $0x28] sm:$0xf] %vm517, %v495
      %529 = vst.msk [vmem:[%s223 + $0x2c] sm:$0xf] %vm517, %v496
      %530 = vst.msk [vmem:[%s223 + $0x30] sm:$0xf] %vm517, %v497
      %531 = vst.msk [vmem:[%s223 + $0x34] sm:$0xf] %vm517, %v498
      %532 = vst.msk [vmem:[%s223 + $0x38] sm:$0xf] %vm517, %v499
      %533 = vst.msk [vmem:[%s223 + $0x3c] sm:$0xf] %vm517, %v500
      %534 = vst.msk [vmem:[%s223 + $0x40] sm:$0xf] %vm517, %v501
      %535 = vst.msk [vmem:[%s223 + $0x44] sm:$0xf] %vm517, %v502
      %536 = vst.msk [vmem:[%s223 + $0x48] sm:$0xf] %vm517, %v503
      %537 = vst.msk [vmem:[%s223 + $0x4c] sm:$0xf] %vm517, %v504
      %538 = vst.msk [vmem:[%s223 + $0x50] sm:$0xf] %vm517, %v505
      %539 = vst.msk [vmem:[%s223 + $0x54] sm:$0xf] %vm517, %v506
      %540 = vst.msk [vmem:[%s223 + $0x58] sm:$0xf] %vm517, %v507
      %541 = vst.msk [vmem:[%s223 + $0x5c] sm:$0xf] %vm517, %v508
      %542 = vst.msk [vmem:[%s223 + $0x60] sm:$0xf] %vm517, %v509
      %543 = vst.msk [vmem:[%s223 + $0x64] sm:$0xf] %vm517, %v510
      %544 = vst.msk [vmem:[%s223 + $0x68] sm:$0xf] %vm517, %v511
      %545 = vst.msk [vmem:[%s223 + $0x6c] sm:$0xf] %vm517, %v512
      %546 = vst.msk [vmem:[%s223 + $0x70] sm:$0xf] %vm517, %v513
      %547 = vst.msk [vmem:[%s223 + $0x74] sm:$0xf] %vm517, %v514
      %548 = vst.msk [vmem:[%s223 + $0x78] sm:$0xf] %vm517, %v515
      %549 = vst.msk [vmem:[%s223 + $0x7c] sm:$0xf] %vm517, %v516
      %s550 = smul.u32 32, %s18
      %p551 = scmp.lt.s32.totalorder %s550, 63
      %s552 = scalar_select %p551, %s550, 63
      %p553 = scmp.lt.s32.totalorder %s19, 0
      %s554 = scalar_select %p553, %s19, 0
      %s555 = sadd.s32 %s554, %s552
      %s556 = smul.addr %s555, 4
      %s557 = scalar_lea.vmem %s3, %s556
      // Predicated region
      $region33: #{reduction_a_forward.5} parent=31 // pred_check
        %p558 = pneg %p124
      $region34: #{reduction_a_forward.5} parent=31 // pred_check_branch
        %560 = sbr.rel (%p558) target = $region36
      $region35: #{reduction_a_forward.5} parent=31 // pred_region
        %s561 = smul.u32 32, %s18
      $region36: #{reduction_a_forward.5} parent=31 // pred_fallthru
        _
    $region32: #{reduction_a_forward.5} parent=5 // pred_fallthru
      _
    %p562 = scmp.le.s32.totalorder 2, %s9
    // Predicated region
    $region37: #{reduction_a_forward.5} parent=5 // pred_check
      %p563 = pneg %p562
    $region38: #{reduction_a_forward.5} parent=5 // pred_check_branch
      %565 = sbr.rel (%p563) target = $region40
    $region39: #{reduction_a_forward.5} parent=5 // pred_region
      %s566 = ssub.s32 %s9, 2
      // Predicated region
      $region41: #{reduction_a_forward.5} parent=39 // pred_check
        %p567 = pneg %p130
      $region42: #{reduction_a_forward.5} parent=39 // pred_check_branch
        %569 = sbr.rel (%p567) target = $region44
      $region43: #{reduction_a_forward.5} parent=39 // pred_region
        %s570 = smul.u32 32, %s20
        %p571 = scmp.lt.s32.totalorder %s570, 63
        %s572 = scalar_select %p571, %s570, 63
        %p573 = scmp.lt.s32.totalorder %s21, 0
        %s574 = scalar_select %p573, %s21, 0
        %s575 = sadd.s32 %s574, %s572
        %s576 = smul.addr %s575, 4
        %s577 = scalar_lea.vmem %s3, %s576
      $region44: #{reduction_a_forward.5} parent=39 // pred_fallthru
        _
    $region40: #{reduction_a_forward.5} parent=5 // pred_fallthru
      _
  $region6: #{reduction_a_forward.5} parent=0 // loop_footer
    %s13 = sadd.s32 1, %s9
  $region7: #{reduction_a_forward.5} parent=0 // loop_footer_branch
    %8 = sbr.rel target = $region3
  $region8: #{reduction_a_forward.5} parent=0 // loop_exit
    _

// kernel: reduction_a_forward.6
$region0: #{reduction_a_forward.6}
  #allocation0 [shape = 'u32[]', space=smem, size = 0x4, offset = 0x4, fixed_abs, tag = 'smem constant byte address 0x4 - core index']
  #allocation1 [shape = 'u32[72,128]{1,0:T(1,128)}', space=vmem, size = 0x9000, scoped, tag = 'internal scratch']
  %s0 = inlined_call_operand.vmem [shape: bf16[512,72], index: 0, kind: input, shape index: {}]
  %s1 = inlined_call_operand.vmem [shape: bf16[72,8], index: 1, kind: input, shape index: {}]
  %s2 = inlined_call_operand.vmem [shape: f32[1,8], index: 2, kind: input, shape index: {}]
  %s3 = inlined_call_operand.vmem [shape: bf16[512,8], index: 3, kind: output, shape index: {}]
  %s4 = sld [smem:[#allocation0]]
  $region45: #{reduction_a_forward.6} parent=0
    _
  %s6 = ssub.s32 1, %s4
  %s7 = scalar_select 0, %s6, %s4
  loop: start=0, step=1, limit=4
  $region2: #{reduction_a_forward.6} parent=0 // loop_pre_header
    _
  $region3: #{reduction_a_forward.6} parent=0 // loop_header
    %s9 = sphi 0, %s13
    %p10 = scmp.ge.s32.totalorder %s9, 4
    %s16 = sphi 0, %s28
    %s17 = sphi 0, %s24
    %s18 = sphi 0, %s16
    %s19 = sphi 0, %s17
    %s20 = sphi 0, %s18
    %s21 = sphi 0, %s19
    %s31 = sphi 0, %s33
    %s34 = sphi 0, %s31
    %s35 = sphi 0, %s34
    %s51 = sphi 0, %s35
    %s57 = sphi 0, %s59
    %s60 = sphi 0, %s57
    %s61 = sphi 0, %s60
    %s77 = sphi 0, %s61
    %s83 = sphi 0, %s85
    %s86 = sphi 0, %s83
    %s87 = sphi 0, %s86
    %s103 = sphi 0, %s87
    %s111 = sphi 0, %s113
    %s114 = sphi 0, %s111
    %s115 = sphi 0, %s114
    %s131 = sphi 0, %s115
  $region4: #{reduction_a_forward.6} parent=0 // loop_header_branch
    %12 = sbr.rel (%p10) target = $region8
  $region5: #{reduction_a_forward.6} parent=0 // loop_body
    %s14 = ssub.s32 %s9, 1
    %s15 = ssub.s32 %s9, 2
    %s22 = sadd.s32 1, %s17
    %p23 = scmp.ge.s32.totalorder %s22, 1
    %s24 = scalar_select %p23, 0, %s22
    %s25 = sadd.s32 1, %s16
    %s26 = scalar_select %p23, %s25, %s16
    %p27 = scmp.ge.s32.totalorder %s26, 2
    %s28 = scalar_select %p27, 0, %s26
    %s29 = ssub.s32 %s16, %s28
    %p30 = scmp.eq.s32.totalorder %s29, 0
    %s32 = sadd.s32 %s31, 1
    %s33 = scalar_select %p30, %s31, %s32
    %p36 = pneg %p30
    %p37 = scmp.eq.s32.totalorder %s9, 1
    %p38 = por %p36, %p37
    %p39 = scmp.ne.s32.totalorder %s31, %s34
    %p40 = scmp.eq.s32.totalorder %s9, 0
    %p41 = por %p39, %p40
    %p42 = scmp.ne.s32.totalorder %s31, %s34
    %p43 = scmp.eq.s32.totalorder %s14, 1
    %p44 = por %p42, %p43
    %p45 = scmp.ne.s32.totalorder %s34, %s35
    %p46 = scmp.eq.s32.totalorder %s14, 0
    %p47 = por %p45, %p46
    %p48 = scmp.ne.s32.totalorder %s34, %s35
    %p49 = scmp.eq.s32.totalorder %s15, 1
    %p50 = por %p48, %p49
    %p52 = scmp.ne.s32.totalorder %s35, %s51
    %p53 = scmp.eq.s32.totalorder %s15, 0
    %p54 = por %p52, %p53
    %s55 = ssub.s32 %s17, %s24
    %p56 = scmp.eq.s32.totalorder %s55, 0
    %s58 = sadd.s32 %s57, 1
    %s59 = scalar_select %p56, %s57, %s58
    %p62 = pneg %p56
    %p63 = scmp.eq.s32.totalorder %s9, 1
    %p64 = por %p62, %p63
    %p65 = scmp.ne.s32.totalorder %s57, %s60
    %p66 = scmp.eq.s32.totalorder %s9, 0
    %p67 = por %p65, %p66
    %p68 = scmp.ne.s32.totalorder %s57, %s60
    %p69 = scmp.eq.s32.totalorder %s14, 1
    %p70 = por %p68, %p69
    %p71 = scmp.ne.s32.totalorder %s60, %s61
    %p72 = scmp.eq.s32.totalorder %s14, 0
    %p73 = por %p71, %p72
    %p74 = scmp.ne.s32.totalorder %s60, %s61
    %p75 = scmp.eq.s32.totalorder %s15, 1
    %p76 = por %p74, %p75
    %p78 = scmp.ne.s32.totalorder %s61, %s77
    %p79 = scmp.eq.s32.totalorder %s15, 0
    %p80 = por %p78, %p79
    %s81 = ssub.s32 %s17, %s24
    %p82 = scmp.eq.s32.totalorder %s81, 0
    %s84 = sadd.s32 %s83, 1
    %s85 = scalar_select %p82, %s83, %s84
    %p88 = pneg %p82
    %p89 = scmp.eq.s32.totalorder %s9, 1
    %p90 = por %p88, %p89
    %p91 = scmp.ne.s32.totalorder %s83, %s86
    %p92 = scmp.eq.s32.totalorder %s9, 0
    %p93 = por %p91, %p92
    %p94 = scmp.ne.s32.totalorder %s83, %s86
    %p95 = scmp.eq.s32.totalorder %s14, 1
    %p96 = por %p94, %p95
    %p97 = scmp.ne.s32.totalorder %s86, %s87
    %p98 = scmp.eq.s32.totalorder %s14, 0
    %p99 = por %p97, %p98
    %p100 = scmp.ne.s32.totalorder %s86, %s87
    %p101 = scmp.eq.s32.totalorder %s15, 1
    %p102 = por %p100, %p101
    %p104 = scmp.ne.s32.totalorder %s87, %s103
    %p105 = scmp.eq.s32.totalorder %s15, 0
    %p106 = por %p104, %p105
    %s107 = ssub.s32 %s16, %s28
    %s108 = ssub.s32 %s17, %s24
    %s109 = sor.u32 %s107, %s108
    %p110 = scmp.eq.s32.totalorder %s109, 0
    %s112 = sadd.s32 %s111, 1
    %s113 = scalar_select %p110, %s111, %s112
    %p116 = pneg %p110
    %p117 = scmp.eq.s32.totalorder %s9, 1
    %p118 = por %p116, %p117
    %p119 = scmp.ne.s32.totalorder %s111, %s114
    %p120 = scmp.eq.s32.totalorder %s9, 0
    %p121 = por %p119, %p120
    %p122 = scmp.ne.s32.totalorder %s111, %s114
    %p123 = scmp.eq.s32.totalorder %s14, 1
    %p124 = por %p122, %p123
    %p125 = scmp.ne.s32.totalorder %s114, %s115
    %p126 = scmp.eq.s32.totalorder %s14, 0
    %p127 = por %p125, %p126
    %p128 = scmp.ne.s32.totalorder %s114, %s115
    %p129 = scmp.eq.s32.totalorder %s15, 1
    %p130 = por %p128, %p129
    %p132 = scmp.ne.s32.totalorder %s115, %s131
    %p133 = scmp.eq.s32.totalorder %s15, 0
    %p134 = por %p132, %p133
    %p135 = scmp.le.s32.totalorder 1, %s9
    %p136 = scmp.lt.s32.totalorder %s9, 3
    %p137 = pnand %p135, %p136
    %p138 = pneg %p137
    // Predicated region
    $region9: #{reduction_a_forward.6} parent=5 // pred_check
      _
    $region10: #{reduction_a_forward.6} parent=5 // pred_check_branch
      %140 = sbr.rel (%p137) target = $region12
    $region11: #{reduction_a_forward.6} parent=5 // pred_region
      %s141 = ssub.s32 %s9, 1
      // Predicated region
      $region13: #{reduction_a_forward.6} parent=11 // pred_check
        %p142 = pneg %p73
      $region14: #{reduction_a_forward.6} parent=11 // pred_check_branch
        %144 = sbr.rel (%p142) target = $region16
      $region15: #{reduction_a_forward.6} parent=11 // pred_region
        %p145 = scmp.lt.s32.totalorder %s19, 0
        %s146 = scalar_select %p145, %s19, 0
        %s147 = smul.addr %s146, 4
        %s148 = scalar_lea.vmem %s1, %s147
      $region16: #{reduction_a_forward.6} parent=11 // pred_fallthru
        _
      // Predicated region
      $region17: #{reduction_a_forward.6} parent=11 // pred_check
        %p149 = pneg %p99
      $region18: #{reduction_a_forward.6} parent=11 // pred_check_branch
        %151 = sbr.rel (%p149) target = $region20
      $region19: #{reduction_a_forward.6} parent=11 // pred_region
        %p152 = scmp.lt.s32.totalorder %s19, 0
        %s153 = scalar_select %p152, %s19, 0
        %s154 = scalar_lea.vmem %s2, %s153
      $region20: #{reduction_a_forward.6} parent=11 // pred_fallthru
        _
    $region12: #{reduction_a_forward.6} parent=5 // pred_fallthru
      _
    %p155 = scmp.lt.s32.totalorder %s9, 2
    // Predicated region
    $region21: #{reduction_a_forward.6} parent=5 // pred_check
      %p156 = pneg %p155
    $region22: #{reduction_a_forward.6} parent=5 // pred_check_branch
      %158 = sbr.rel (%p156) target = $region24
    $region23: #{reduction_a_forward.6} parent=5 // pred_region
      // Predicated region
      $region25: #{reduction_a_forward.6} parent=23 // pred_check
        %p159 = pneg %p41
      $region26: #{reduction_a_forward.6} parent=23 // pred_check_branch
        %161 = sbr.rel (%p159) target = $region28
      $region27: #{reduction_a_forward.6} parent=23 // pred_region
        %s162 = smul.u32 32, %s16
        %p163 = scmp.lt.s32.totalorder %s162, 63
        %s164 = scalar_select %p163, %s162, 63
        %s165 = smul.addr %s164, 4
        %s166 = scalar_lea.vmem %s0, %s165
        %s167 = smul.u32 32, %s16
      $region28: #{reduction_a_forward.6} parent=23 // pred_fallthru
        _
    $region24: #{reduction_a_forward.6} parent=5 // pred_fallthru
      _
    %p168 = scmp.le.s32.totalorder 1, %s9
    %p169 = scmp.lt.s32.totalorder %s9, 3
    %p170 = pnand %p168, %p169
    %p171 = pneg %p170
    // Predicated region
    $region29: #{reduction_a_forward.6} parent=5 // pred_check
      _
    $region30: #{reduction_a_forward.6} parent=5 // pred_check_branch
      %173 = sbr.rel (%p170) target = $region32
    $region31: #{reduction_a_forward.6} parent=5 // pred_region
      %s174 = ssub.s32 %s9, 1
      %s175 = smul.u32 32, %s18
      %p176 = scmp.lt.s32.totalorder %s175, 63
      %s177 = scalar_select %p176, %s175, 63
      %s178 = smul.addr %s177, 4
      %s179 = scalar_lea.vmem %s0, %s178
      %p180 = pneg %p47
      %p181 = pneg %p44
      %p182 = scmp.lt.s32.totalorder %s19, 0
      %s183 = scalar_select %p182, %s19, 0
      %s184 = smul.addr %s183, 4
      %s185 = scalar_lea.vmem %s1, %s184
      %p186 = pneg %p73
      %p187 = pneg %p70
      %p188 = scmp.lt.s32.totalorder %s19, 0
      %s189 = scalar_select %p188, %s19, 0
      %s190 = scalar_lea.vmem %s2, %s189
      %p191 = pneg %p99
      %p192 = pneg %p96
      %p193 = pneg %p127
      %p194 = pneg %p124
      %s195 = smul.u32 32, %s18
      %p196 = scmp.lt.s32.totalorder %s195, 63
      %s197 = scalar_select %p196, %s195, 63
      %p198 = scmp.lt.s32.totalorder %s19, 0
      %s199 = scalar_select %p198, %s19, 0
      %s200 = sadd.s32 %s199, %s197
      %s201 = smul.addr %s200, 4
      %s202 = scalar_lea.vmem %s3, %s201
      %s203 = smul.u32 32, %s18
      %p204 = scmp.lt.s32.totalorder %s203, 63
      %s205 = scalar_select %p204, %s203, 63
      %s206 = smul.addr %s205, 4
      %s207 = scalar_lea.vmem %s0, %s206
      %s208 = smul.u32 32, %s18
      %p209 = scmp.lt.s32.totalorder %s19, 0
      %s210 = scalar_select %p209, %s19, 0
      %s211 = smul.addr %s210, 4
      %s212 = scalar_lea.vmem %s1, %s211
      %p213 = scmp.lt.s32.totalorder %s19, 0
      %s214 = scalar_select %p213, %s19, 0
      %s215 = scalar_lea.vmem %s2, %s214
      %s216 = smul.u32 32, %s18
      %p217 = scmp.lt.s32.totalorder %s216, 63
      %s218 = scalar_select %p217, %s216, 63
      %p219 = scmp.lt.s32.totalorder %s19, 0
      %s220 = scalar_select %p219, %s19, 0
      %s221 = sadd.s32 %s220, %s218
      %s222 = smul.addr %s221, 4
      %s223 = scalar_lea.vmem %s3, %s222
      %s224 = smul.u32 32, %s18
      %v226 = vld [vmem:[%s207] sm:$0xf]
      %v227 = vld [vmem:[%s207 + $0x4] sm:$0xf]
      %v228 = vld [vmem:[%s207 + $0x8] sm:$0xf]
      %v229 = vld [vmem:[%s207 + $0xc] sm:$0xf]
      %v230 = vld [vmem:[%s207 + $0x10] sm:$0xf]
      %v231 = vld [vmem:[%s207 + $0x14] sm:$0xf]
      %v232 = vld [vmem:[%s207 + $0x18] sm:$0xf]
      %v233 = vld [vmem:[%s207 + $0x1c] sm:$0xf]
      %v234 = vld [vmem:[%s207 + $0x20] sm:$0xf]
      %v235 = vld [vmem:[%s207 + $0x24] sm:$0xf]
      %v236 = vld [vmem:[%s207 + $0x28] sm:$0xf]
      %v237 = vld [vmem:[%s207 + $0x2c] sm:$0xf]
      %v238 = vld [vmem:[%s207 + $0x30] sm:$0xf]
      %v239 = vld [vmem:[%s207 + $0x34] sm:$0xf]
      %v240 = vld [vmem:[%s207 + $0x38] sm:$0xf]
      %v241 = vld [vmem:[%s207 + $0x3c] sm:$0xf]
      %v242 = vld [vmem:[%s207 + $0x40] sm:$0xf]
      %v243 = vld [vmem:[%s207 + $0x44] sm:$0xf]
      %v244 = vld [vmem:[%s207 + $0x48] sm:$0xf]
      %v245 = vld [vmem:[%s207 + $0x4c] sm:$0xf]
      %v246 = vld [vmem:[%s207 + $0x50] sm:$0xf]
      %v247 = vld [vmem:[%s207 + $0x54] sm:$0xf]
      %v248 = vld [vmem:[%s207 + $0x58] sm:$0xf]
      %v249 = vld [vmem:[%s207 + $0x5c] sm:$0xf]
      %v250 = vld [vmem:[%s207 + $0x60] sm:$0xf]
      %v251 = vld [vmem:[%s207 + $0x64] sm:$0xf]
      %v252 = vld [vmem:[%s207 + $0x68] sm:$0xf]
      %v253 = vld [vmem:[%s207 + $0x6c] sm:$0xf]
      %v254 = vld [vmem:[%s207 + $0x70] sm:$0xf]
      %v255 = vld [vmem:[%s207 + $0x74] sm:$0xf]
      %v256 = vld [vmem:[%s207 + $0x78] sm:$0xf]
      %v257 = vld [vmem:[%s207 + $0x7c] sm:$0xf]
      %v258 = vld [vmem:[%s212] sm:$0xf]
      %v259 = vld [vmem:[%s212 + $0x4] sm:$0xf]
      %v260 = vld [vmem:[%s212 + $0x8] sm:$0xf]
      %v261 = vld [vmem:[%s212 + $0xc] sm:$0xf]
      %v262 = vld [vmem:[%s212 + $0x10] sm:$0xf]
      %v263 = vld [vmem:[%s212 + $0x14] sm:$0xf]
      %v264 = vld [vmem:[%s212 + $0x18] sm:$0xf]
      %v265 = vld [vmem:[%s212 + $0x1c] sm:$0xf]
      %v266 = vld [vmem:[%s212 + $0x20] sm:$0xf]
      %v267 = vld [vmem:[%s215] sm:$0x1]
      %v269 = vperm.slane %v267, 0
      %v303 = vunpack.c.l.b16 %v226
      %v304 = vunpack.c.l.b16 %v227
      %v305 = vunpack.c.l.b16 %v228
      %v306 = vunpack.c.l.b16 %v229
      %v307 = vunpack.c.l.b16 %v230
      %v308 = vunpack.c.l.b16 %v231
      %v309 = vunpack.c.l.b16 %v232
      %v310 = vunpack.c.l.b16 %v233
      %v311 = vunpack.c.l.b16 %v234
      %v312 = vunpack.c.l.b16 %v235
      %v313 = vunpack.c.l.b16 %v236
      %v314 = vunpack.c.l.b16 %v237
      %v315 = vunpack.c.l.b16 %v238
      %v316 = vunpack.c.l.b16 %v239
      %v317 = vunpack.c.l.b16 %v240
      %v318 = vunpack.c.l.b16 %v241
      %v319 = vunpack.c.l.b16 %v242
      %v320 = vunpack.c.l.b16 %v243
      %v321 = vunpack.c.l.b16 %v244
      %v322 = vunpack.c.l.b16 %v245
      %v323 = vunpack.c.l.b16 %v246
      %v324 = vunpack.c.l.b16 %v247
      %v325 = vunpack.c.l.b16 %v248
      %v326 = vunpack.c.l.b16 %v249
      %v327 = vunpack.c.l.b16 %v250
      %v328 = vunpack.c.l.b16 %v251
      %v329 = vunpack.c.l.b16 %v252
      %v330 = vunpack.c.l.b16 %v253
      %v331 = vunpack.c.l.b16 %v254
      %v332 = vunpack.c.l.b16 %v255
      %v333 = vunpack.c.l.b16 %v256
      %v334 = vunpack.c.l.b16 %v257
      %v335 = vpack.c.b16 %v304, %v303
      %v336 = vpack.c.b16 %v306, %v305
      %v337 = vpack.c.b16 %v308, %v307
      %v338 = vpack.c.b16 %v310, %v309
      %v339 = vpack.c.b16 %v312, %v311
      %v340 = vpack.c.b16 %v314, %v313
      %v341 = vpack.c.b16 %v316, %v315
      %v342 = vpack.c.b16 %v318, %v317
      %v343 = vpack.c.b16 %v320, %v319
      %v344 = vpack.c.b16 %v322, %v321
      %v345 = vpack.c.b16 %v324, %v323
      %v346 = vpack.c.b16 %v326, %v325
      %v347 = vpack.c.b16 %v328, %v327
      %v348 = vpack.c.b16 %v330, %v329
      %v349 = vpack.c.b16 %v332, %v331
      %v350 = vpack.c.b16 %v334, %v333
      %v360 = vunpack.c.l.b16 %v258
      %v361 = vunpack.c.l.b16 %v259
      %v362 = vunpack.c.l.b16 %v260
      %v363 = vunpack.c.l.b16 %v261
      %v364 = vunpack.c.l.b16 %v262
      %v365 = vunpack.c.l.b16 %v263
      %v366 = vunpack.c.l.b16 %v264
      %v367 = vunpack.c.l.b16 %v265
      %v368 = vunpack.c.l.b16 %v266
      %v369 = vpack.c.b16 %v361, %v360
      %v370 = vpack.c.b16 %v363, %v362
      %v371 = vpack.c.b16 %v365, %v364
      %v372 = vpack.c.b16 %v367, %v366
      %v373 = vpack.c.b16 %v368, %v368
      %vm378 = vcmask 588800
      %v380 = vsel %vm378, %v335, 0
      %v383 = vsel %vm378, %v336, 0
      %v386 = vsel %vm378, %v337, 0
      %v389 = vsel %vm378, %v338, 0
      %v392 = vsel %vm378, %v339, 0
      %v395 = vsel %vm378, %v340, 0
      %v398 = vsel %vm378, %v341, 0
      %v401 = vsel %vm378, %v342, 0
      %v404 = vsel %vm378, %v343, 0
      %v407 = vsel %vm378, %v344, 0
      %v410 = vsel %vm378, %v345, 0
      %v413 = vsel %vm378, %v346, 0
      %v416 = vsel %vm378, %v347, 0
      %v419 = vsel %vm378, %v348, 0
      %v422 = vsel %vm378, %v349, 0
      %v425 = vsel %vm378, %v350, 0
      %vm427 = vcmask 1043456
      %v429 = vsel %vm427, %v373, 0
      %431 = vmatpush.bf16.msra.mxu0 0
      %432 = vmatpush.bf16.msra.mxu0 0
      %433 = vmatpush.bf16.msra.mxu0 0
      %434 = vmatpush.bf16.msra.mxu0 %v429
      %435 = vmatpush.bf16.msra.mxu0 %v372
      %436 = vmatpush.bf16.msra.mxu0 %v371
      %437 = vmatpush.bf16.msra.mxu0 %v370
      %438 = vmatpush.bf16.msra.mxu0 %v369
      %439 = vmatmul.bf16.gmra.mxu0 %v380
      %v440 = vpop.f32.mrf.mxu0
      %v441 = vadd.f32 %v269, %v440
      %v442 = vpop.f32.mrf.mxu0
      %v443 = vadd.f32 %v269, %v442
      %444 = vmatmul.bf16.gmra.mxu0 %v383
      %v445 = vpop.f32.mrf.mxu0
      %v446 = vadd.f32 %v269, %v445
      %v447 = vpop.f32.mrf.mxu0
      %v448 = vadd.f32 %v269, %v447
      %449 = vmatmul.bf16.gmra.mxu0 %v386
      %v450 = vpop.f32.mrf.mxu0
      %v451 = vadd.f32 %v269, %v450
      %v452 = vpop.f32.mrf.mxu0
      %v453 = vadd.f32 %v269, %v452
      %454 = vmatmul.bf16.gmra.mxu0 %v389
      %v455 = vpop.f32.mrf.mxu0
      %v456 = vadd.f32 %v269, %v455
      %v457 = vpop.f32.mrf.mxu0
      %v458 = vadd.f32 %v269, %v457
      %459 = vmatmul.bf16.gmra.mxu0 %v392
      %v460 = vpop.f32.mrf.mxu0
      %v461 = vadd.f32 %v269, %v460
      %v462 = vpop.f32.mrf.mxu0
      %v463 = vadd.f32 %v269, %v462
      %464 = vmatmul.bf16.gmra.mxu0 %v395
      %v465 = vpop.f32.mrf.mxu0
      %v466 = vadd.f32 %v269, %v465
      %v467 = vpop.f32.mrf.mxu0
      %v468 = vadd.f32 %v269, %v467
      %469 = vmatmul.bf16.gmra.mxu0 %v398
      %v470 = vpop.f32.mrf.mxu0
      %v471 = vadd.f32 %v269, %v470
      %v472 = vpop.f32.mrf.mxu0
      %v473 = vadd.f32 %v269, %v472
      %474 = vmatmul.bf16.gmra.mxu0 %v401
      %v475 = vpop.f32.mrf.mxu0
      %v476 = vadd.f32 %v269, %v475
      %v477 = vpop.f32.mrf.mxu0
      %v478 = vadd.f32 %v269, %v477
      %479 = vmatmul.bf16.gmra.mxu0 %v404
      %v480 = vpop.f32.mrf.mxu0
      %v481 = vadd.f32 %v269, %v480
      %v482 = vpop.f32.mrf.mxu0
      %v483 = vadd.f32 %v269, %v482
      %484 = vmatmul.bf16.gmra.mxu0 %v407
      %v485 = vpop.f32.mrf.mxu0
      %v486 = vadd.f32 %v269, %v485
      %v487 = vpop.f32.mrf.mxu0
      %v488 = vadd.f32 %v269, %v487
      %489 = vmatmul.bf16.gmra.mxu0 %v410
      %v490 = vpop.f32.mrf.mxu0
      %v491 = vadd.f32 %v269, %v490
      %v492 = vpop.f32.mrf.mxu0
      %v493 = vadd.f32 %v269, %v492
      %494 = vmatmul.bf16.gmra.mxu0 %v413
      %v495 = vpop.f32.mrf.mxu0
      %v496 = vadd.f32 %v269, %v495
      %v497 = vpop.f32.mrf.mxu0
      %v498 = vadd.f32 %v269, %v497
      %499 = vmatmul.bf16.gmra.mxu0 %v416
      %v500 = vpop.f32.mrf.mxu0
      %v501 = vadd.f32 %v269, %v500
      %v502 = vpop.f32.mrf.mxu0
      %v503 = vadd.f32 %v269, %v502
      %504 = vmatmul.bf16.gmra.mxu0 %v419
      %v505 = vpop.f32.mrf.mxu0
      %v506 = vadd.f32 %v269, %v505
      %v507 = vpop.f32.mrf.mxu0
      %v508 = vadd.f32 %v269, %v507
      %509 = vmatmul.bf16.gmra.mxu0 %v422
      %v510 = vpop.f32.mrf.mxu0
      %v511 = vadd.f32 %v269, %v510
      %v512 = vpop.f32.mrf.mxu0
      %v513 = vadd.f32 %v269, %v512
      %514 = vmatmul.bf16.gmra.mxu0 %v425
      %v515 = vpop.f32.mrf.mxu0
      %v516 = vadd.f32 %v269, %v515
      %v517 = vpop.f32.mrf.mxu0
      %v518 = vadd.f32 %v269, %v517
      %519 = vdwg.mxu0
      %v520 = vmax.f32 %v441, 0.0
      %v521 = vmax.f32 %v443, 0.0
      %v522 = vmax.f32 %v446, 0.0
      %v523 = vmax.f32 %v448, 0.0
      %v524 = vmax.f32 %v451, 0.0
      %v525 = vmax.f32 %v453, 0.0
      %v526 = vmax.f32 %v456, 0.0
      %v527 = vmax.f32 %v458, 0.0
      %v528 = vmax.f32 %v461, 0.0
      %v529 = vmax.f32 %v463, 0.0
      %v530 = vmax.f32 %v466, 0.0
      %v531 = vmax.f32 %v468, 0.0
      %v532 = vmax.f32 %v471, 0.0
      %v533 = vmax.f32 %v473, 0.0
      %v534 = vmax.f32 %v476, 0.0
      %v535 = vmax.f32 %v478, 0.0
      %v536 = vmax.f32 %v481, 0.0
      %v537 = vmax.f32 %v483, 0.0
      %v538 = vmax.f32 %v486, 0.0
      %v539 = vmax.f32 %v488, 0.0
      %v540 = vmax.f32 %v491, 0.0
      %v541 = vmax.f32 %v493, 0.0
      %v542 = vmax.f32 %v496, 0.0
      %v543 = vmax.f32 %v498, 0.0
      %v544 = vmax.f32 %v501, 0.0
      %v545 = vmax.f32 %v503, 0.0
      %v546 = vmax.f32 %v506, 0.0
      %v547 = vmax.f32 %v508, 0.0
      %v548 = vmax.f32 %v511, 0.0
      %v549 = vmax.f32 %v513, 0.0
      %v550 = vmax.f32 %v516, 0.0
      %v551 = vmax.f32 %v518, 0.0
      %v552 = vmin.f32 %v520, 6.0
      %v553 = vmin.f32 %v521, 6.0
      %v554 = vmin.f32 %v522, 6.0
      %v555 = vmin.f32 %v523, 6.0
      %v556 = vmin.f32 %v524, 6.0
      %v557 = vmin.f32 %v525, 6.0
      %v558 = vmin.f32 %v526, 6.0
      %v559 = vmin.f32 %v527, 6.0
      %v560 = vmin.f32 %v528, 6.0
      %v561 = vmin.f32 %v529, 6.0
      %v562 = vmin.f32 %v530, 6.0
      %v563 = vmin.f32 %v531, 6.0
      %v564 = vmin.f32 %v532, 6.0
      %v565 = vmin.f32 %v533, 6.0
      %v566 = vmin.f32 %v534, 6.0
      %v567 = vmin.f32 %v535, 6.0
      %v568 = vmin.f32 %v536, 6.0
      %v569 = vmin.f32 %v537, 6.0
      %v570 = vmin.f32 %v538, 6.0
      %v571 = vmin.f32 %v539, 6.0
      %v572 = vmin.f32 %v540, 6.0
      %v573 = vmin.f32 %v541, 6.0
      %v574 = vmin.f32 %v542, 6.0
      %v575 = vmin.f32 %v543, 6.0
      %v576 = vmin.f32 %v544, 6.0
      %v577 = vmin.f32 %v545, 6.0
      %v578 = vmin.f32 %v546, 6.0
      %v579 = vmin.f32 %v547, 6.0
      %v580 = vmin.f32 %v548, 6.0
      %v581 = vmin.f32 %v549, 6.0
      %v582 = vmin.f32 %v550, 6.0
      %v583 = vmin.f32 %v551, 6.0
      %v584 = vpack.c.bf16 %v552, %v552
      %v585 = vpack.c.bf16 %v553, %v553
      %v586 = vpack.c.bf16 %v554, %v554
      %v587 = vpack.c.bf16 %v555, %v555
      %v588 = vpack.c.bf16 %v556, %v556
      %v589 = vpack.c.bf16 %v557, %v557
      %v590 = vpack.c.bf16 %v558, %v558
      %v591 = vpack.c.bf16 %v559, %v559
      %v592 = vpack.c.bf16 %v560, %v560
      %v593 = vpack.c.bf16 %v561, %v561
      %v594 = vpack.c.bf16 %v562, %v562
      %v595 = vpack.c.bf16 %v563, %v563
      %v596 = vpack.c.bf16 %v564, %v564
      %v597 = vpack.c.bf16 %v565, %v565
      %v598 = vpack.c.bf16 %v566, %v566
      %v599 = vpack.c.bf16 %v567, %v567
      %v600 = vpack.c.bf16 %v568, %v568
      %v601 = vpack.c.bf16 %v569, %v569
      %v602 = vpack.c.bf16 %v570, %v570
      %v603 = vpack.c.bf16 %v571, %v571
      %v604 = vpack.c.bf16 %v572, %v572
      %v605 = vpack.c.bf16 %v573, %v573
      %v606 = vpack.c.bf16 %v574, %v574
      %v607 = vpack.c.bf16 %v575, %v575
      %v608 = vpack.c.bf16 %v576, %v576
      %v609 = vpack.c.bf16 %v577, %v577
      %v610 = vpack.c.bf16 %v578, %v578
      %v611 = vpack.c.bf16 %v579, %v579
      %v612 = vpack.c.bf16 %v580, %v580
      %v613 = vpack.c.bf16 %v581, %v581
      %v614 = vpack.c.bf16 %v582, %v582
      %v615 = vpack.c.bf16 %v583, %v583
      %vm616 = vcmask 60416
      %617 = vst.msk [vmem:[%s223] sm:$0xf] %vm616, %v584
      %618 = vst.msk [vmem:[%s223 + $0x4] sm:$0xf] %vm616, %v585
      %619 = vst.msk [vmem:[%s223 + $0x8] sm:$0xf] %vm616, %v586
      %620 = vst.msk [vmem:[%s223 + $0xc] sm:$0xf] %vm616, %v587
      %621 = vst.msk [vmem:[%s223 + $0x10] sm:$0xf] %vm616, %v588
      %622 = vst.msk [vmem:[%s223 + $0x14] sm:$0xf] %vm616, %v589
      %623 = vst.msk [vmem:[%s223 + $0x18] sm:$0xf] %vm616, %v590
      %624 = vst.msk [vmem:[%s223 + $0x1c] sm:$0xf] %vm616, %v591
      %625 = vst.msk [vmem:[%s223 + $0x20] sm:$0xf] %vm616, %v592
      %626 = vst.msk [vmem:[%s223 + $0x24] sm:$0xf] %vm616, %v593
      %627 = vst.msk [vmem:[%s223 + $0x28] sm:$0xf] %vm616, %v594
      %628 = vst.msk [vmem:[%s223 + $0x2c] sm:$0xf] %vm616, %v595
      %629 = vst.msk [vmem:[%s223 + $0x30] sm:$0xf] %vm616, %v596
      %630 = vst.msk [vmem:[%s223 + $0x34] sm:$0xf] %vm616, %v597
      %631 = vst.msk [vmem:[%s223 + $0x38] sm:$0xf] %vm616, %v598
      %632 = vst.msk [vmem:[%s223 + $0x3c] sm:$0xf] %vm616, %v599
      %633 = vst.msk [vmem:[%s223 + $0x40] sm:$0xf] %vm616, %v600
      %634 = vst.msk [vmem:[%s223 + $0x44] sm:$0xf] %vm616, %v601
      %635 = vst.msk [vmem:[%s223 + $0x48] sm:$0xf] %vm616, %v602
      %636 = vst.msk [vmem:[%s223 + $0x4c] sm:$0xf] %vm616, %v603
      %637 = vst.msk [vmem:[%s223 + $0x50] sm:$0xf] %vm616, %v604
      %638 = vst.msk [vmem:[%s223 + $0x54] sm:$0xf] %vm616, %v605
      %639 = vst.msk [vmem:[%s223 + $0x58] sm:$0xf] %vm616, %v606
      %640 = vst.msk [vmem:[%s223 + $0x5c] sm:$0xf] %vm616, %v607
      %641 = vst.msk [vmem:[%s223 + $0x60] sm:$0xf] %vm616, %v608
      %642 = vst.msk [vmem:[%s223 + $0x64] sm:$0xf] %vm616, %v609
      %643 = vst.msk [vmem:[%s223 + $0x68] sm:$0xf] %vm616, %v610
      %644 = vst.msk [vmem:[%s223 + $0x6c] sm:$0xf] %vm616, %v611
      %645 = vst.msk [vmem:[%s223 + $0x70] sm:$0xf] %vm616, %v612
      %646 = vst.msk [vmem:[%s223 + $0x74] sm:$0xf] %vm616, %v613
      %647 = vst.msk [vmem:[%s223 + $0x78] sm:$0xf] %vm616, %v614
      %648 = vst.msk [vmem:[%s223 + $0x7c] sm:$0xf] %vm616, %v615
      %s649 = smul.u32 32, %s18
      %p650 = scmp.lt.s32.totalorder %s649, 63
      %s651 = scalar_select %p650, %s649, 63
      %p652 = scmp.lt.s32.totalorder %s19, 0
      %s653 = scalar_select %p652, %s19, 0
      %s654 = sadd.s32 %s653, %s651
      %s655 = smul.addr %s654, 4
      %s656 = scalar_lea.vmem %s3, %s655
      // Predicated region
      $region33: #{reduction_a_forward.6} parent=31 // pred_check
        %p657 = pneg %p124
      $region34: #{reduction_a_forward.6} parent=31 // pred_check_branch
        %659 = sbr.rel (%p657) target = $region36
      $region35: #{reduction_a_forward.6} parent=31 // pred_region
        %s660 = smul.u32 32, %s18
      $region36: #{reduction_a_forward.6} parent=31 // pred_fallthru
        _
    $region32: #{reduction_a_forward.6} parent=5 // pred_fallthru
      _
    %p661 = scmp.le.s32.totalorder 2, %s9
    // Predicated region
    $region37: #{reduction_a_forward.6} parent=5 // pred_check
      %p662 = pneg %p661
    $region38: #{reduction_a_forward.6} parent=5 // pred_check_branch
      %664 = sbr.rel (%p662) target = $region40
    $region39: #{reduction_a_forward.6} parent=5 // pred_region
      %s665 = ssub.s32 %s9, 2
      // Predicated region
      $region41: #{reduction_a_forward.6} parent=39 // pred_check
        %p666 = pneg %p130
      $region42: #{reduction_a_forward.6} parent=39 // pred_check_branch
        %668 = sbr.rel (%p666) target = $region44
      $region43: #{reduction_a_forward.6} parent=39 // pred_region
        %s669 = smul.u32 32, %s20
        %p670 = scmp.lt.s32.totalorder %s669, 63
        %s671 = scalar_select %p670, %s669, 63
        %p672 = scmp.lt.s32.totalorder %s21, 0
        %s673 = scalar_select %p672, %s21, 0
        %s674 = sadd.s32 %s673, %s671
        %s675 = smul.addr %s674, 4
        %s676 = scalar_lea.vmem %s3, %s675
      $region44: #{reduction_a_forward.6} parent=39 // pred_fallthru
        _
    $region40: #{reduction_a_forward.6} parent=5 // pred_fallthru
      _
  $region6: #{reduction_a_forward.6} parent=0 // loop_footer
    %s13 = sadd.s32 1, %s9
  $region7: #{reduction_a_forward.6} parent=0 // loop_footer_branch
    %8 = sbr.rel target = $region3
  $region8: #{reduction_a_forward.6} parent=0 // loop_exit
    _

// kernel: reduction_a_forward.7
$region0: #{reduction_a_forward.7}
  #allocation0 [shape = 'u32[]', space=smem, size = 0x4, offset = 0x4, fixed_abs, tag = 'smem constant byte address 0x4 - core index']
  #allocation1 [shape = 'u32[72,128]{1,0:T(1,128)}', space=vmem, size = 0x9000, scoped, tag = 'internal scratch']
  %s0 = inlined_call_operand.vmem [shape: bf16[104,72], index: 0, kind: input, shape index: {}]
  %s1 = inlined_call_operand.vmem [shape: bf16[72,8], index: 1, kind: input, shape index: {}]
  %s2 = inlined_call_operand.vmem [shape: f32[1,8], index: 2, kind: input, shape index: {}]
  %s3 = inlined_call_operand.vmem [shape: f32[104,8], index: 3, kind: output, shape index: {}]
  %s4 = sld [smem:[#allocation0]]
  $region22: #{reduction_a_forward.7} parent=0
    _
  %s6 = ssub.s32 1, %s4
  %s7 = scalar_select 0, %s6, %s4
  // Predicated region
  $region2: #{reduction_a_forward.7} parent=0 // pred_check
    _
  $region3: #{reduction_a_forward.7} parent=0 // pred_check_branch
    %9 = sbr.rel (0) target = $region5
  $region4: #{reduction_a_forward.7} parent=0 // pred_region
    _
  $region5: #{reduction_a_forward.7} parent=0 // pred_fallthru
    _
  // Predicated region
  $region6: #{reduction_a_forward.7} parent=0 // pred_check
    _
  $region7: #{reduction_a_forward.7} parent=0 // pred_check_branch
    %11 = sbr.rel (0) target = $region9
  $region8: #{reduction_a_forward.7} parent=0 // pred_region
    _
  $region9: #{reduction_a_forward.7} parent=0 // pred_fallthru
    _
  // Predicated region
  $region10: #{reduction_a_forward.7} parent=0 // pred_check
    _
  $region11: #{reduction_a_forward.7} parent=0 // pred_check_branch
    %13 = sbr.rel (0) target = $region13
  $region12: #{reduction_a_forward.7} parent=0 // pred_region
    _
  $region13: #{reduction_a_forward.7} parent=0 // pred_fallthru
    _
  %v15 = vld [vmem:[%s0] sm:$0xf]
  %v16 = vld [vmem:[%s0 + $0x4] sm:$0xf]
  %v17 = vld [vmem:[%s0 + $0x8] sm:$0xf]
  %v18 = vld [vmem:[%s0 + $0xc] sm:$0xf]
  %v19 = vld [vmem:[%s0 + $0x10] sm:$0xf]
  %v20 = vld [vmem:[%s0 + $0x14] sm:$0xf]
  %v21 = vld [vmem:[%s0 + $0x18] sm:$0xf]
  %v22 = vld [vmem:[%s0 + $0x1c] sm:$0xf]
  %v23 = vld [vmem:[%s0 + $0x20] sm:$0xf]
  %v24 = vld [vmem:[%s0 + $0x24] sm:$0xf]
  %v25 = vld [vmem:[%s0 + $0x28] sm:$0xf]
  %v26 = vld [vmem:[%s0 + $0x2c] sm:$0xf]
  %v27 = vld [vmem:[%s0 + $0x30] sm:$0xf]
  %v28 = vld [vmem:[%s1] sm:$0xf]
  %v29 = vld [vmem:[%s1 + $0x4] sm:$0xf]
  %v30 = vld [vmem:[%s1 + $0x8] sm:$0xf]
  %v31 = vld [vmem:[%s1 + $0xc] sm:$0xf]
  %v32 = vld [vmem:[%s1 + $0x10] sm:$0xf]
  %v33 = vld [vmem:[%s1 + $0x14] sm:$0xf]
  %v34 = vld [vmem:[%s1 + $0x18] sm:$0xf]
  %v35 = vld [vmem:[%s1 + $0x1c] sm:$0xf]
  %v36 = vld [vmem:[%s1 + $0x20] sm:$0xf]
  %v37 = vld [vmem:[%s2] sm:$0x1]
  %v39 = vperm.slane %v37, 0
  %v54 = vunpack.c.l.b16 %v15
  %v55 = vunpack.c.l.b16 %v16
  %v56 = vunpack.c.l.b16 %v17
  %v57 = vunpack.c.l.b16 %v18
  %v58 = vunpack.c.l.b16 %v19
  %v59 = vunpack.c.l.b16 %v20
  %v60 = vunpack.c.l.b16 %v21
  %v61 = vunpack.c.l.b16 %v22
  %v62 = vunpack.c.l.b16 %v23
  %v63 = vunpack.c.l.b16 %v24
  %v64 = vunpack.c.l.b16 %v25
  %v65 = vunpack.c.l.b16 %v26
  %v66 = vunpack.c.l.b16 %v27
  %v67 = vpack.c.b16 %v55, %v54
  %v68 = vpack.c.b16 %v57, %v56
  %v69 = vpack.c.b16 %v59, %v58
  %v70 = vpack.c.b16 %v61, %v60
  %v71 = vpack.c.b16 %v63, %v62
  %v72 = vpack.c.b16 %v65, %v64
  %v73 = vpack.c.b16 %v66, %v66
  %v83 = vunpack.c.l.b16 %v28
  %v84 = vunpack.c.l.b16 %v29
  %v85 = vunpack.c.l.b16 %v30
  %v86 = vunpack.c.l.b16 %v31
  %v87 = vunpack.c.l.b16 %v32
  %v88 = vunpack.c.l.b16 %v33
  %v89 = vunpack.c.l.b16 %v34
  %v90 = vunpack.c.l.b16 %v35
  %v91 = vunpack.c.l.b16 %v36
  %v92 = vpack.c.b16 %v84, %v83
  %v93 = vpack.c.b16 %v86, %v85
  %v94 = vpack.c.b16 %v88, %v87
  %v95 = vpack.c.b16 %v90, %v89
  %v96 = vpack.c.b16 %v91, %v91
  %vm101 = vcmask 588800
  %v103 = vsel %vm101, %v67, 0
  %v106 = vsel %vm101, %v68, 0
  %v109 = vsel %vm101, %v69, 0
  %v112 = vsel %vm101, %v70, 0
  %v115 = vsel %vm101, %v71, 0
  %v118 = vsel %vm101, %v72, 0
  %v121 = vsel %vm101, %v73, 0
  %vm123 = vcmask 1043456
  %v125 = vsel %vm123, %v96, 0
  %127 = vmatpush.bf16.msra.mxu0 0
  %128 = vmatpush.bf16.msra.mxu0 0
  %129 = vmatpush.bf16.msra.mxu0 0
  %130 = vmatpush.bf16.msra.mxu0 %v125
  %131 = vmatpush.bf16.msra.mxu0 %v95
  %132 = vmatpush.bf16.msra.mxu0 %v94
  %133 = vmatpush.bf16.msra.mxu0 %v93
  %134 = vmatpush.bf16.msra.mxu0 %v92
  %135 = vmatmul.bf16.gmra.mxu0 %v103
  %v136 = vpop.f32.mrf.mxu0
  %v137 = vadd.f32 %v39, %v136
  %v138 = vpop.f32.mrf.mxu0
  %v139 = vadd.f32 %v39, %v138
  %140 = vmatmul.bf16.gmra.mxu0 %v106
  %v141 = vpop.f32.mrf.mxu0
  %v142 = vadd.f32 %v39, %v141
  %v143 = vpop.f32.mrf.mxu0
  %v144 = vadd.f32 %v39, %v143
  %145 = vmatmul.bf16.gmra.mxu0 %v109
  %v146 = vpop.f32.mrf.mxu0
  %v147 = vadd.f32 %v39, %v146
  %v148 = vpop.f32.mrf.mxu0
  %v149 = vadd.f32 %v39, %v148
  %150 = vmatmul.bf16.gmra.mxu0 %v112
  %v151 = vpop.f32.mrf.mxu0
  %v152 = vadd.f32 %v39, %v151
  %v153 = vpop.f32.mrf.mxu0
  %v154 = vadd.f32 %v39, %v153
  %155 = vmatmul.bf16.gmra.mxu0 %v115
  %v156 = vpop.f32.mrf.mxu0
  %v157 = vadd.f32 %v39, %v156
  %v158 = vpop.f32.mrf.mxu0
  %v159 = vadd.f32 %v39, %v158
  %160 = vmatmul.bf16.gmra.mxu0 %v118
  %v161 = vpop.f32.mrf.mxu0
  %v162 = vadd.f32 %v39, %v161
  %v163 = vpop.f32.mrf.mxu0
  %v164 = vadd.f32 %v39, %v163
  %165 = vmatmul.bf16.gmra.mxu0 %v121
  %v166 = vpop.f32.mrf.mxu0
  %v167 = vadd.f32 %v39, %v166
  %v168 = vpop.f32.mrf.mxu0
  %169 = vdwg.mxu0
  %v170 = vmax.f32 %v137, 0.0
  %v171 = vmax.f32 %v139, 0.0
  %v172 = vmax.f32 %v142, 0.0
  %v173 = vmax.f32 %v144, 0.0
  %v174 = vmax.f32 %v147, 0.0
  %v175 = vmax.f32 %v149, 0.0
  %v176 = vmax.f32 %v152, 0.0
  %v177 = vmax.f32 %v154, 0.0
  %v178 = vmax.f32 %v157, 0.0
  %v179 = vmax.f32 %v159, 0.0
  %v180 = vmax.f32 %v162, 0.0
  %v181 = vmax.f32 %v164, 0.0
  %v182 = vmax.f32 %v167, 0.0
  %v183 = vmin.f32 %v170, 6.0
  %v184 = vmin.f32 %v171, 6.0
  %v185 = vmin.f32 %v172, 6.0
  %v186 = vmin.f32 %v173, 6.0
  %v187 = vmin.f32 %v174, 6.0
  %v188 = vmin.f32 %v175, 6.0
  %v189 = vmin.f32 %v176, 6.0
  %v190 = vmin.f32 %v177, 6.0
  %v191 = vmin.f32 %v178, 6.0
  %v192 = vmin.f32 %v179, 6.0
  %v193 = vmin.f32 %v180, 6.0
  %v194 = vmin.f32 %v181, 6.0
  %v195 = vmin.f32 %v182, 6.0
  %vm196 = vcmask 64512
  %197 = vst.msk [vmem:[%s3] sm:$0xff] %vm196, %v183
  %198 = vst.msk [vmem:[%s3 + $0x8] sm:$0xff] %vm196, %v184
  %199 = vst.msk [vmem:[%s3 + $0x10] sm:$0xff] %vm196, %v185
  %200 = vst.msk [vmem:[%s3 + $0x18] sm:$0xff] %vm196, %v186
  %201 = vst.msk [vmem:[%s3 + $0x20] sm:$0xff] %vm196, %v187
  %202 = vst.msk [vmem:[%s3 + $0x28] sm:$0xff] %vm196, %v188
  %203 = vst.msk [vmem:[%s3 + $0x30] sm:$0xff] %vm196, %v189
  %204 = vst.msk [vmem:[%s3 + $0x38] sm:$0xff] %vm196, %v190
  %205 = vst.msk [vmem:[%s3 + $0x40] sm:$0xff] %vm196, %v191
  %206 = vst.msk [vmem:[%s3 + $0x48] sm:$0xff] %vm196, %v192
  %207 = vst.msk [vmem:[%s3 + $0x50] sm:$0xff] %vm196, %v193
  %208 = vst.msk [vmem:[%s3 + $0x58] sm:$0xff] %vm196, %v194
  %209 = vst.msk [vmem:[%s3 + $0x60] sm:$0xff] %vm196, %v195
  // Predicated region
  $region14: #{reduction_a_forward.7} parent=0 // pred_check
    _
  $region15: #{reduction_a_forward.7} parent=0 // pred_check_branch
    %211 = sbr.rel (0) target = $region17
  $region16: #{reduction_a_forward.7} parent=0 // pred_region
    _
  $region17: #{reduction_a_forward.7} parent=0 // pred_fallthru
    _
  // Predicated region
  $region18: #{reduction_a_forward.7} parent=0 // pred_check
    _
  $region19: #{reduction_a_forward.7} parent=0 // pred_check_branch
    %213 = sbr.rel (0) target = $region21
  $region20: #{reduction_a_forward.7} parent=0 // pred_region
    _
  $region21: #{reduction_a_forward.7} parent=0 // pred_fallthru
    _

// kernel: reduction_a_forward.4
$region0: #{reduction_a_forward.4}
  #allocation0 [shape = 'u32[]', space=smem, size = 0x4, offset = 0x4, fixed_abs, tag = 'smem constant byte address 0x4 - core index']
  #allocation1 [shape = 'u32[72,128]{1,0:T(1,128)}', space=vmem, size = 0x9000, scoped, tag = 'internal scratch']
  %s0 = inlined_call_operand.vmem [shape: f32[104,72], index: 0, kind: input, shape index: {}]
  %s1 = inlined_call_operand.vmem [shape: bf16[72,8], index: 1, kind: input, shape index: {}]
  %s2 = inlined_call_operand.vmem [shape: f32[1,8], index: 2, kind: input, shape index: {}]
  %s3 = inlined_call_operand.vmem [shape: f32[104,8], index: 3, kind: output, shape index: {0}]
  %s4 = inlined_call_operand.vmem [shape: f32[104,8], index: 4, kind: output, shape index: {1}]
  %5 = xla_tuple %s3, %s4
  %s6 = sld [smem:[#allocation0]]
  $region30: #{reduction_a_forward.4} parent=0
    _
  %s8 = ssub.s32 1, %s6
  %s9 = scalar_select 0, %s8, %s6
  // Predicated region
  $region2: #{reduction_a_forward.4} parent=0 // pred_check
    _
  $region3: #{reduction_a_forward.4} parent=0 // pred_check_branch
    %11 = sbr.rel (0) target = $region5
  $region4: #{reduction_a_forward.4} parent=0 // pred_region
    _
  $region5: #{reduction_a_forward.4} parent=0 // pred_fallthru
    _
  // Predicated region
  $region6: #{reduction_a_forward.4} parent=0 // pred_check
    _
  $region7: #{reduction_a_forward.4} parent=0 // pred_check_branch
    %13 = sbr.rel (0) target = $region9
  $region8: #{reduction_a_forward.4} parent=0 // pred_region
    _
  $region9: #{reduction_a_forward.4} parent=0 // pred_fallthru
    _
  // Predicated region
  $region10: #{reduction_a_forward.4} parent=0 // pred_check
    _
  $region11: #{reduction_a_forward.4} parent=0 // pred_check_branch
    %15 = sbr.rel (0) target = $region13
  $region12: #{reduction_a_forward.4} parent=0 // pred_region
    _
  $region13: #{reduction_a_forward.4} parent=0 // pred_fallthru
    _
  %v17 = vld [vmem:[%s0] sm:$0xff]
  %v18 = vld [vmem:[%s0 + $0x8] sm:$0xff]
  %v19 = vld [vmem:[%s0 + $0x10] sm:$0xff]
  %v20 = vld [vmem:[%s0 + $0x18] sm:$0xff]
  %v21 = vld [vmem:[%s0 + $0x20] sm:$0xff]
  %v22 = vld [vmem:[%s0 + $0x28] sm:$0xff]
  %v23 = vld [vmem:[%s0 + $0x30] sm:$0xff]
  %v24 = vld [vmem:[%s0 + $0x38] sm:$0xff]
  %v25 = vld [vmem:[%s0 + $0x40] sm:$0xff]
  %v26 = vld [vmem:[%s0 + $0x48] sm:$0xff]
  %v27 = vld [vmem:[%s0 + $0x50] sm:$0xff]
  %v28 = vld [vmem:[%s0 + $0x58] sm:$0xff]
  %v29 = vld [vmem:[%s0 + $0x60] sm:$0xff]
  %v30 = vpack.c.bf16 %v18, %v17
  %v31 = vpack.c.bf16 %v20, %v19
  %v32 = vpack.c.bf16 %v22, %v21
  %v33 = vpack.c.bf16 %v24, %v23
  %v34 = vpack.c.bf16 %v26, %v25
  %v35 = vpack.c.bf16 %v28, %v27
  %v36 = vpack.c.bf16 %v29, %v29
  %v37 = vld [vmem:[%s1] sm:$0xf]
  %v38 = vld [vmem:[%s1 + $0x4] sm:$0xf]
  %v39 = vld [vmem:[%s1 + $0x8] sm:$0xf]
  %v40 = vld [vmem:[%s1 + $0xc] sm:$0xf]
  %v41 = vld [vmem:[%s1 + $0x10] sm:$0xf]
  %v42 = vld [vmem:[%s1 + $0x14] sm:$0xf]
  %v43 = vld [vmem:[%s1 + $0x18] sm:$0xf]
  %v44 = vld [vmem:[%s1 + $0x1c] sm:$0xf]
  %v45 = vld [vmem:[%s1 + $0x20] sm:$0xf]
  %v46 = vld [vmem:[%s2] sm:$0x1]
  %v48 = vperm.slane %v46, 0
  %v59 = vunpack.c.l.b16 %v37
  %v60 = vunpack.c.l.b16 %v38
  %v61 = vunpack.c.l.b16 %v39
  %v62 = vunpack.c.l.b16 %v40
  %v63 = vunpack.c.l.b16 %v41
  %v64 = vunpack.c.l.b16 %v42
  %v65 = vunpack.c.l.b16 %v43
  %v66 = vunpack.c.l.b16 %v44
  %v67 = vunpack.c.l.b16 %v45
  %v68 = vpack.c.b16 %v60, %v59
  %v69 = vpack.c.b16 %v62, %v61
  %v70 = vpack.c.b16 %v64, %v63
  %v71 = vpack.c.b16 %v66, %v65
  %v72 = vpack.c.b16 %v67, %v67
  %vm77 = vcmask 588800
  %v79 = vsel %vm77, %v30, 0
  %v82 = vsel %vm77, %v31, 0
  %v85 = vsel %vm77, %v32, 0
  %v88 = vsel %vm77, %v33, 0
  %v91 = vsel %vm77, %v34, 0
  %v94 = vsel %vm77, %v35, 0
  %v97 = vsel %vm77, %v36, 0
  %vm99 = vcmask 1043456
  %v101 = vsel %vm99, %v72, 0
  %103 = vmatpush.bf16.msra.mxu0 0
  %104 = vmatpush.bf16.msra.mxu0 0
  %105 = vmatpush.bf16.msra.mxu0 0
  %106 = vmatpush.bf16.msra.mxu0 %v101
  %107 = vmatpush.bf16.msra.mxu0 %v71
  %108 = vmatpush.bf16.msra.mxu0 %v70
  %109 = vmatpush.bf16.msra.mxu0 %v69
  %110 = vmatpush.bf16.msra.mxu0 %v68
  %111 = vmatmul.bf16.gmra.mxu0 %v79
  %v112 = vpop.f32.mrf.mxu0
  %v113 = vadd.f32 %v48, %v112
  %v114 = vpop.f32.mrf.mxu0
  %v115 = vadd.f32 %v48, %v114
  %116 = vmatmul.bf16.gmra.mxu0 %v82
  %v117 = vpop.f32.mrf.mxu0
  %v118 = vadd.f32 %v48, %v117
  %v119 = vpop.f32.mrf.mxu0
  %v120 = vadd.f32 %v48, %v119
  %121 = vmatmul.bf16.gmra.mxu0 %v85
  %v122 = vpop.f32.mrf.mxu0
  %v123 = vadd.f32 %v48, %v122
  %v124 = vpop.f32.mrf.mxu0
  %v125 = vadd.f32 %v48, %v124
  %126 = vmatmul.bf16.gmra.mxu0 %v88
  %v127 = vpop.f32.mrf.mxu0
  %v128 = vadd.f32 %v48, %v127
  %v129 = vpop.f32.mrf.mxu0
  %v130 = vadd.f32 %v48, %v129
  %131 = vmatmul.bf16.gmra.mxu0 %v91
  %v132 = vpop.f32.mrf.mxu0
  %v133 = vadd.f32 %v48, %v132
  %v134 = vpop.f32.mrf.mxu0
  %v135 = vadd.f32 %v48, %v134
  %136 = vmatmul.bf16.gmra.mxu0 %v94
  %v137 = vpop.f32.mrf.mxu0
  %v138 = vadd.f32 %v48, %v137
  %v139 = vpop.f32.mrf.mxu0
  %v140 = vadd.f32 %v48, %v139
  %141 = vmatmul.bf16.gmra.mxu0 %v97
  %v142 = vpop.f32.mrf.mxu0
  %v143 = vadd.f32 %v48, %v142
  %v144 = vpop.f32.mrf.mxu0
  %145 = vdwg.mxu0
  %v146 = vmax.f32 %v113, 0.0
  %v147 = vmax.f32 %v115, 0.0
  %v148 = vmax.f32 %v118, 0.0
  %v149 = vmax.f32 %v120, 0.0
  %v150 = vmax.f32 %v123, 0.0
  %v151 = vmax.f32 %v125, 0.0
  %v152 = vmax.f32 %v128, 0.0
  %v153 = vmax.f32 %v130, 0.0
  %v154 = vmax.f32 %v133, 0.0
  %v155 = vmax.f32 %v135, 0.0
  %v156 = vmax.f32 %v138, 0.0
  %v157 = vmax.f32 %v140, 0.0
  %v158 = vmax.f32 %v143, 0.0
  %v159 = vmin.f32 %v146, 6.0
  %v160 = vmin.f32 %v147, 6.0
  %v161 = vmin.f32 %v148, 6.0
  %v162 = vmin.f32 %v149, 6.0
  %v163 = vmin.f32 %v150, 6.0
  %v164 = vmin.f32 %v151, 6.0
  %v165 = vmin.f32 %v152, 6.0
  %v166 = vmin.f32 %v153, 6.0
  %v167 = vmin.f32 %v154, 6.0
  %v168 = vmin.f32 %v155, 6.0
  %v169 = vmin.f32 %v156, 6.0
  %v170 = vmin.f32 %v157, 6.0
  %v171 = vmin.f32 %v158, 6.0
  %vm172 = vcmask 64512
  %173 = vst.msk [vmem:[%s3] sm:$0xff] %vm172, %v159
  %174 = vst.msk [vmem:[%s3 + $0x8] sm:$0xff] %vm172, %v160
  %175 = vst.msk [vmem:[%s3 + $0x10] sm:$0xff] %vm172, %v161
  %176 = vst.msk [vmem:[%s3 + $0x18] sm:$0xff] %vm172, %v162
  %177 = vst.msk [vmem:[%s3 + $0x20] sm:$0xff] %vm172, %v163
  %178 = vst.msk [vmem:[%s3 + $0x28] sm:$0xff] %vm172, %v164
  %179 = vst.msk [vmem:[%s3 + $0x30] sm:$0xff] %vm172, %v165
  %180 = vst.msk [vmem:[%s3 + $0x38] sm:$0xff] %vm172, %v166
  %181 = vst.msk [vmem:[%s3 + $0x40] sm:$0xff] %vm172, %v167
  %182 = vst.msk [vmem:[%s3 + $0x48] sm:$0xff] %vm172, %v168
  %183 = vst.msk [vmem:[%s3 + $0x50] sm:$0xff] %vm172, %v169
  %184 = vst.msk [vmem:[%s3 + $0x58] sm:$0xff] %vm172, %v170
  %185 = vst.msk [vmem:[%s3 + $0x60] sm:$0xff] %vm172, %v171
  %199 = vrot.lane.b32.xlu0 %v17, 120
  %v200 = vpop.permute.xlu0 %199
  %201 = vrot.lane.b32.xlu0 %v18, 120
  %v202 = vpop.permute.xlu0 %201
  %203 = vrot.lane.b32.xlu0 %v19, 120
  %v204 = vpop.permute.xlu0 %203
  %205 = vrot.lane.b32.xlu0 %v20, 120
  %v206 = vpop.permute.xlu0 %205
  %207 = vrot.lane.b32.xlu0 %v21, 120
  %v208 = vpop.permute.xlu0 %207
  %209 = vrot.lane.b32.xlu0 %v22, 120
  %v210 = vpop.permute.xlu0 %209
  %211 = vrot.lane.b32.xlu0 %v23, 120
  %v212 = vpop.permute.xlu0 %211
  %213 = vrot.lane.b32.xlu0 %v24, 120
  %v214 = vpop.permute.xlu0 %213
  %215 = vrot.lane.b32.xlu0 %v25, 120
  %v216 = vpop.permute.xlu0 %215
  %217 = vrot.lane.b32.xlu0 %v26, 120
  %v218 = vpop.permute.xlu0 %217
  %219 = vrot.lane.b32.xlu0 %v27, 120
  %v220 = vpop.permute.xlu0 %219
  %221 = vrot.lane.b32.xlu0 %v28, 120
  %v222 = vpop.permute.xlu0 %221
  %223 = vrot.lane.b32.xlu0 %v29, 120
  %v224 = vpop.permute.xlu0 %223
  %v238 = vmax.f32 %v17, %v200
  %v239 = vmax.f32 %v18, %v202
  %v240 = vmax.f32 %v19, %v204
  %v241 = vmax.f32 %v20, %v206
  %v242 = vmax.f32 %v21, %v208
  %v243 = vmax.f32 %v22, %v210
  %v244 = vmax.f32 %v23, %v212
  %v245 = vmax.f32 %v24, %v214
  %v246 = vmax.f32 %v25, %v216
  %v247 = vmax.f32 %v26, %v218
  %v248 = vmax.f32 %v27, %v220
  %v249 = vmax.f32 %v28, %v222
  %v250 = vmax.f32 %v29, %v224
  %251 = vrot.lane.b32.xlu0 %v17, 112
  %v252 = vpop.permute.xlu0 %251
  %253 = vrot.lane.b32.xlu0 %v18, 112
  %v254 = vpop.permute.xlu0 %253
  %255 = vrot.lane.b32.xlu0 %v19, 112
  %v256 = vpop.permute.xlu0 %255
  %257 = vrot.lane.b32.xlu0 %v20, 112
  %v258 = vpop.permute.xlu0 %257
  %259 = vrot.lane.b32.xlu0 %v21, 112
  %v260 = vpop.permute.xlu0 %259
  %261 = vrot.lane.b32.xlu0 %v22, 112
  %v262 = vpop.permute.xlu0 %261
  %263 = vrot.lane.b32.xlu0 %v23, 112
  %v264 = vpop.permute.xlu0 %263
  %265 = vrot.lane.b32.xlu0 %v24, 112
  %v266 = vpop.permute.xlu0 %265
  %267 = vrot.lane.b32.xlu0 %v25, 112
  %v268 = vpop.permute.xlu0 %267
  %269 = vrot.lane.b32.xlu0 %v26, 112
  %v270 = vpop.permute.xlu0 %269
  %271 = vrot.lane.b32.xlu0 %v27, 112
  %v272 = vpop.permute.xlu0 %271
  %273 = vrot.lane.b32.xlu0 %v28, 112
  %v274 = vpop.permute.xlu0 %273
  %275 = vrot.lane.b32.xlu0 %v29, 112
  %v276 = vpop.permute.xlu0 %275
  %v290 = vmax.f32 %v238, %v252
  %v291 = vmax.f32 %v239, %v254
  %v292 = vmax.f32 %v240, %v256
  %v293 = vmax.f32 %v241, %v258
  %v294 = vmax.f32 %v242, %v260
  %v295 = vmax.f32 %v243, %v262
  %v296 = vmax.f32 %v244, %v264
  %v297 = vmax.f32 %v245, %v266
  %v298 = vmax.f32 %v246, %v268
  %v299 = vmax.f32 %v247, %v270
  %v300 = vmax.f32 %v248, %v272
  %v301 = vmax.f32 %v249, %v274
  %v302 = vmax.f32 %v250, %v276
  %303 = vrot.lane.b32.xlu0 %v17, 104
  %v304 = vpop.permute.xlu0 %303
  %305 = vrot.lane.b32.xlu0 %v18, 104
  %v306 = vpop.permute.xlu0 %305
  %307 = vrot.lane.b32.xlu0 %v19, 104
  %v308 = vpop.permute.xlu0 %307
  %309 = vrot.lane.b32.xlu0 %v20, 104
  %v310 = vpop.permute.xlu0 %309
  %311 = vrot.lane.b32.xlu0 %v21, 104
  %v312 = vpop.permute.xlu0 %311
  %313 = vrot.lane.b32.xlu0 %v22, 104
  %v314 = vpop.permute.xlu0 %313
  %315 = vrot.lane.b32.xlu0 %v23, 104
  %v316 = vpop.permute.xlu0 %315
  %317 = vrot.lane.b32.xlu0 %v24, 104
  %v318 = vpop.permute.xlu0 %317
  %319 = vrot.lane.b32.xlu0 %v25, 104
  %v320 = vpop.permute.xlu0 %319
  %321 = vrot.lane.b32.xlu0 %v26, 104
  %v322 = vpop.permute.xlu0 %321
  %323 = vrot.lane.b32.xlu0 %v27, 104
  %v324 = vpop.permute.xlu0 %323
  %325 = vrot.lane.b32.xlu0 %v28, 104
  %v326 = vpop.permute.xlu0 %325
  %327 = vrot.lane.b32.xlu0 %v29, 104
  %v328 = vpop.permute.xlu0 %327
  %v342 = vmax.f32 %v290, %v304
  %v343 = vmax.f32 %v291, %v306
  %v344 = vmax.f32 %v292, %v308
  %v345 = vmax.f32 %v293, %v310
  %v346 = vmax.f32 %v294, %v312
  %v347 = vmax.f32 %v295, %v314
  %v348 = vmax.f32 %v296, %v316
  %v349 = vmax.f32 %v297, %v318
  %v350 = vmax.f32 %v298, %v320
  %v351 = vmax.f32 %v299, %v322
  %v352 = vmax.f32 %v300, %v324
  %v353 = vmax.f32 %v301, %v326
  %v354 = vmax.f32 %v302, %v328
  %355 = vrot.lane.b32.xlu0 %v17, 96
  %v356 = vpop.permute.xlu0 %355
  %357 = vrot.lane.b32.xlu0 %v18, 96
  %v358 = vpop.permute.xlu0 %357
  %359 = vrot.lane.b32.xlu0 %v19, 96
  %v360 = vpop.permute.xlu0 %359
  %361 = vrot.lane.b32.xlu0 %v20, 96
  %v362 = vpop.permute.xlu0 %361
  %363 = vrot.lane.b32.xlu0 %v21, 96
  %v364 = vpop.permute.xlu0 %363
  %365 = vrot.lane.b32.xlu0 %v22, 96
  %v366 = vpop.permute.xlu0 %365
  %367 = vrot.lane.b32.xlu0 %v23, 96
  %v368 = vpop.permute.xlu0 %367
  %369 = vrot.lane.b32.xlu0 %v24, 96
  %v370 = vpop.permute.xlu0 %369
  %371 = vrot.lane.b32.xlu0 %v25, 96
  %v372 = vpop.permute.xlu0 %371
  %373 = vrot.lane.b32.xlu0 %v26, 96
  %v374 = vpop.permute.xlu0 %373
  %375 = vrot.lane.b32.xlu0 %v27, 96
  %v376 = vpop.permute.xlu0 %375
  %377 = vrot.lane.b32.xlu0 %v28, 96
  %v378 = vpop.permute.xlu0 %377
  %379 = vrot.lane.b32.xlu0 %v29, 96
  %v380 = vpop.permute.xlu0 %379
  %v394 = vmax.f32 %v342, %v356
  %v395 = vmax.f32 %v343, %v358
  %v396 = vmax.f32 %v344, %v360
  %v397 = vmax.f32 %v345, %v362
  %v398 = vmax.f32 %v346, %v364
  %v399 = vmax.f32 %v347, %v366
  %v400 = vmax.f32 %v348, %v368
  %v401 = vmax.f32 %v349, %v370
  %v402 = vmax.f32 %v350, %v372
  %v403 = vmax.f32 %v351, %v374
  %v404 = vmax.f32 %v352, %v376
  %v405 = vmax.f32 %v353, %v378
  %v406 = vmax.f32 %v354, %v380
  %407 = vrot.lane.b32.xlu0 %v17, 88
  %v408 = vpop.permute.xlu0 %407
  %409 = vrot.lane.b32.xlu0 %v18, 88
  %v410 = vpop.permute.xlu0 %409
  %411 = vrot.lane.b32.xlu0 %v19, 88
  %v412 = vpop.permute.xlu0 %411
  %413 = vrot.lane.b32.xlu0 %v20, 88
  %v414 = vpop.permute.xlu0 %413
  %415 = vrot.lane.b32.xlu0 %v21, 88
  %v416 = vpop.permute.xlu0 %415
  %417 = vrot.lane.b32.xlu0 %v22, 88
  %v418 = vpop.permute.xlu0 %417
  %419 = vrot.lane.b32.xlu0 %v23, 88
  %v420 = vpop.permute.xlu0 %419
  %421 = vrot.lane.b32.xlu0 %v24, 88
  %v422 = vpop.permute.xlu0 %421
  %423 = vrot.lane.b32.xlu0 %v25, 88
  %v424 = vpop.permute.xlu0 %423
  %425 = vrot.lane.b32.xlu0 %v26, 88
  %v426 = vpop.permute.xlu0 %425
  %427 = vrot.lane.b32.xlu0 %v27, 88
  %v428 = vpop.permute.xlu0 %427
  %429 = vrot.lane.b32.xlu0 %v28, 88
  %v430 = vpop.permute.xlu0 %429
  %431 = vrot.lane.b32.xlu0 %v29, 88
  %v432 = vpop.permute.xlu0 %431
  %v446 = vmax.f32 %v394, %v408
  %v447 = vmax.f32 %v395, %v410
  %v448 = vmax.f32 %v396, %v412
  %v449 = vmax.f32 %v397, %v414
  %v450 = vmax.f32 %v398, %v416
  %v451 = vmax.f32 %v399, %v418
  %v452 = vmax.f32 %v400, %v420
  %v453 = vmax.f32 %v401, %v422
  %v454 = vmax.f32 %v402, %v424
  %v455 = vmax.f32 %v403, %v426
  %v456 = vmax.f32 %v404, %v428
  %v457 = vmax.f32 %v405, %v430
  %v458 = vmax.f32 %v406, %v432
  %459 = vrot.lane.b32.xlu0 %v17, 80
  %v460 = vpop.permute.xlu0 %459
  %461 = vrot.lane.b32.xlu0 %v18, 80
  %v462 = vpop.permute.xlu0 %461
  %463 = vrot.lane.b32.xlu0 %v19, 80
  %v464 = vpop.permute.xlu0 %463
  %465 = vrot.lane.b32.xlu0 %v20, 80
  %v466 = vpop.permute.xlu0 %465
  %467 = vrot.lane.b32.xlu0 %v21, 80
  %v468 = vpop.permute.xlu0 %467
  %469 = vrot.lane.b32.xlu0 %v22, 80
  %v470 = vpop.permute.xlu0 %469
  %471 = vrot.lane.b32.xlu0 %v23, 80
  %v472 = vpop.permute.xlu0 %471
  %473 = vrot.lane.b32.xlu0 %v24, 80
  %v474 = vpop.permute.xlu0 %473
  %475 = vrot.lane.b32.xlu0 %v25, 80
  %v476 = vpop.permute.xlu0 %475
  %477 = vrot.lane.b32.xlu0 %v26, 80
  %v478 = vpop.permute.xlu0 %477
  %479 = vrot.lane.b32.xlu0 %v27, 80
  %v480 = vpop.permute.xlu0 %479
  %481 = vrot.lane.b32.xlu0 %v28, 80
  %v482 = vpop.permute.xlu0 %481
  %483 = vrot.lane.b32.xlu0 %v29, 80
  %v484 = vpop.permute.xlu0 %483
  %v498 = vmax.f32 %v446, %v460
  %v499 = vmax.f32 %v447, %v462
  %v500 = vmax.f32 %v448, %v464
  %v501 = vmax.f32 %v449, %v466
  %v502 = vmax.f32 %v450, %v468
  %v503 = vmax.f32 %v451, %v470
  %v504 = vmax.f32 %v452, %v472
  %v505 = vmax.f32 %v453, %v474
  %v506 = vmax.f32 %v454, %v476
  %v507 = vmax.f32 %v455, %v478
  %v508 = vmax.f32 %v456, %v480
  %v509 = vmax.f32 %v457, %v482
  %v510 = vmax.f32 %v458, %v484
  %511 = vrot.lane.b32.xlu0 %v17, 72
  %v512 = vpop.permute.xlu0 %511
  %513 = vrot.lane.b32.xlu0 %v18, 72
  %v514 = vpop.permute.xlu0 %513
  %515 = vrot.lane.b32.xlu0 %v19, 72
  %v516 = vpop.permute.xlu0 %515
  %517 = vrot.lane.b32.xlu0 %v20, 72
  %v518 = vpop.permute.xlu0 %517
  %519 = vrot.lane.b32.xlu0 %v21, 72
  %v520 = vpop.permute.xlu0 %519
  %521 = vrot.lane.b32.xlu0 %v22, 72
  %v522 = vpop.permute.xlu0 %521
  %523 = vrot.lane.b32.xlu0 %v23, 72
  %v524 = vpop.permute.xlu0 %523
  %525 = vrot.lane.b32.xlu0 %v24, 72
  %v526 = vpop.permute.xlu0 %525
  %527 = vrot.lane.b32.xlu0 %v25, 72
  %v528 = vpop.permute.xlu0 %527
  %529 = vrot.lane.b32.xlu0 %v26, 72
  %v530 = vpop.permute.xlu0 %529
  %531 = vrot.lane.b32.xlu0 %v27, 72
  %v532 = vpop.permute.xlu0 %531
  %533 = vrot.lane.b32.xlu0 %v28, 72
  %v534 = vpop.permute.xlu0 %533
  %535 = vrot.lane.b32.xlu0 %v29, 72
  %v536 = vpop.permute.xlu0 %535
  %v550 = vmax.f32 %v498, %v512
  %v551 = vmax.f32 %v499, %v514
  %v552 = vmax.f32 %v500, %v516
  %v553 = vmax.f32 %v501, %v518
  %v554 = vmax.f32 %v502, %v520
  %v555 = vmax.f32 %v503, %v522
  %v556 = vmax.f32 %v504, %v524
  %v557 = vmax.f32 %v505, %v526
  %v558 = vmax.f32 %v506, %v528
  %v559 = vmax.f32 %v507, %v530
  %v560 = vmax.f32 %v508, %v532
  %v561 = vmax.f32 %v509, %v534
  %v562 = vmax.f32 %v510, %v536
  %563 = vrot.lane.b32.xlu0 %v17, 64
  %v564 = vpop.permute.xlu0 %563
  %565 = vrot.lane.b32.xlu0 %v18, 64
  %v566 = vpop.permute.xlu0 %565
  %567 = vrot.lane.b32.xlu0 %v19, 64
  %v568 = vpop.permute.xlu0 %567
  %569 = vrot.lane.b32.xlu0 %v20, 64
  %v570 = vpop.permute.xlu0 %569
  %571 = vrot.lane.b32.xlu0 %v21, 64
  %v572 = vpop.permute.xlu0 %571
  %573 = vrot.lane.b32.xlu0 %v22, 64
  %v574 = vpop.permute.xlu0 %573
  %575 = vrot.lane.b32.xlu0 %v23, 64
  %v576 = vpop.permute.xlu0 %575
  %577 = vrot.lane.b32.xlu0 %v24, 64
  %v578 = vpop.permute.xlu0 %577
  %579 = vrot.lane.b32.xlu0 %v25, 64
  %v580 = vpop.permute.xlu0 %579
  %581 = vrot.lane.b32.xlu0 %v26, 64
  %v582 = vpop.permute.xlu0 %581
  %583 = vrot.lane.b32.xlu0 %v27, 64
  %v584 = vpop.permute.xlu0 %583
  %585 = vrot.lane.b32.xlu0 %v28, 64
  %v586 = vpop.permute.xlu0 %585
  %587 = vrot.lane.b32.xlu0 %v29, 64
  %v588 = vpop.permute.xlu0 %587
  %v602 = vmax.f32 %v550, %v564
  %v603 = vmax.f32 %v551, %v566
  %v604 = vmax.f32 %v552, %v568
  %v605 = vmax.f32 %v553, %v570
  %v606 = vmax.f32 %v554, %v572
  %v607 = vmax.f32 %v555, %v574
  %v608 = vmax.f32 %v556, %v576
  %v609 = vmax.f32 %v557, %v578
  %v610 = vmax.f32 %v558, %v580
  %v611 = vmax.f32 %v559, %v582
  %v612 = vmax.f32 %v560, %v584
  %v613 = vmax.f32 %v561, %v586
  %v614 = vmax.f32 %v562, %v588
  %615 = vst.msk [vmem:[%s4] sm:$0xff] %vm172, %v602
  %616 = vst.msk [vmem:[%s4 + $0x8] sm:$0xff] %vm172, %v603
  %617 = vst.msk [vmem:[%s4 + $0x10] sm:$0xff] %vm172, %v604
  %618 = vst.msk [vmem:[%s4 + $0x18] sm:$0xff] %vm172, %v605
  %619 = vst.msk [vmem:[%s4 + $0x20] sm:$0xff] %vm172, %v606
  %620 = vst.msk [vmem:[%s4 + $0x28] sm:$0xff] %vm172, %v607
  %621 = vst.msk [vmem:[%s4 + $0x30] sm:$0xff] %vm172, %v608
  %622 = vst.msk [vmem:[%s4 + $0x38] sm:$0xff] %vm172, %v609
  %623 = vst.msk [vmem:[%s4 + $0x40] sm:$0xff] %vm172, %v610
  %624 = vst.msk [vmem:[%s4 + $0x48] sm:$0xff] %vm172, %v611
  %625 = vst.msk [vmem:[%s4 + $0x50] sm:$0xff] %vm172, %v612
  %626 = vst.msk [vmem:[%s4 + $0x58] sm:$0xff] %vm172, %v613
  %627 = vst.msk [vmem:[%s4 + $0x60] sm:$0xff] %vm172, %v614
  // Predicated region
  $region14: #{reduction_a_forward.4} parent=0 // pred_check
    _
  $region15: #{reduction_a_forward.4} parent=0 // pred_check_branch
    %629 = sbr.rel (0) target = $region17
  $region16: #{reduction_a_forward.4} parent=0 // pred_region
    _
  $region17: #{reduction_a_forward.4} parent=0 // pred_fallthru
    _
  // Predicated region
  $region18: #{reduction_a_forward.4} parent=0 // pred_check
    _
  $region19: #{reduction_a_forward.4} parent=0 // pred_check_branch
    %631 = sbr.rel (0) target = $region21
  $region20: #{reduction_a_forward.4} parent=0 // pred_region
    _
  $region21: #{reduction_a_forward.4} parent=0 // pred_fallthru
    _
  // Predicated region
  $region22: #{reduction_a_forward.4} parent=0 // pred_check
    _
  $region23: #{reduction_a_forward.4} parent=0 // pred_check_branch
    %633 = sbr.rel (0) target = $region25
  $region24: #{reduction_a_forward.4} parent=0 // pred_region
    _
  $region25: #{reduction_a_forward.4} parent=0 // pred_fallthru
    _
  // Predicated region
  $region26: #{reduction_a_forward.4} parent=0 // pred_check
    _
  $region27: #{reduction_a_forward.4} parent=0 // pred_check_branch
    %635 = sbr.rel (0) target = $region29
  $region28: #{reduction_a_forward.4} parent=0 // pred_region
    _
  $region29: #{reduction_a_forward.4} parent=0 // pred_fallthru
    _

</llo_original>
